<compile_context>
chip_gen: v7x
topology: tpu7x:2x2x1
jax: 0.10.0
libtpu: 0.0.40
codegen_flags: <defaults>
</compile_context>

<pallas_src>
import jax
import jax.numpy as jnp
from jax.experimental import pallas as pl
from jax.experimental.pallas import tpu as pltpu

# Relative spatial offsets of the 9 taps of a 3x3 conv (row-major, pad=1).
_TAPS = tuple((dh, dw) for dh in (-1, 0, 1) for dw in (-1, 0, 1))


# ---------------------------------------------------------------------------
# Fused forward kernel (one pallas_call for the entire network)
# ---------------------------------------------------------------------------

def _build_fused_kernel(num_rdbs, num_convs, H, W):
    HW = H * W

    def kernel(*refs):
        x_ref, mask_ref = refs[0], refs[1]
        o_ref = refs[-1]
        wrefs = list(refs[2:-1])

        def next_wb():
            w = wrefs.pop(0)[...]
            b = wrefs.pop(0)[...]
            return w, b

        def conv3x3(x, w, b, do_relu):
            # x: (Cin, HW). Build the (9*Cin, HW) im2col matrix with rolled,
            # boundary-masked taps, then one MXU matmul with K = 9*Cin.
            cols = []
            for t, (dh, dw) in enumerate(_TAPS):
                off = dh * W + dw
                if off == 0:
                    cols.append(x)                       # center tap: always valid
                else:
                    xs = pltpu.roll(x, shift=(-off) % HW, axis=1)
                    cols.append(xs * mask_ref[t])        # (Cin, HW) * (1, HW)
            xcol = jnp.concatenate(cols, axis=0)         # (9*Cin, HW)
            out = jax.lax.dot_general(
                w, xcol, (((1,), (0,)), ((), ())),
                preferred_element_type=jnp.float32) + b
            return jnp.maximum(out, 0.0) if do_relu else out

        def conv1x1(x, w, b, do_relu):
            out = jax.lax.dot_general(
                w, x, (((1,), (0,)), ((), ())),
                preferred_element_type=jnp.float32) + b
            return jnp.maximum(out, 0.0) if do_relu else out

        x = x_ref[0].astype(jnp.float32)                 # (Cin, HW)

        # convin + reluin
        w, b = next_wb()
        x = conv3x3(x, w, b, True)

        feats = []
        for _ in range(num_rdbs):
            y_res = x
            feat = x
            for _ in range(num_convs):
                w, b = next_wb()
                out = conv3x3(feat, w, b, True)          # relu(bn(conv(.)))
                feat = jnp.concatenate([feat, out], axis=0)   # dense concat (VMEM)
            w, b = next_wb()
            x = y_res + conv1x1(feat, w, b, True)        # y + relu(conv1(.))
            feats.append(x)

        y = feats[0] if num_rdbs == 1 else jnp.concatenate(feats, axis=0)

        w, b = next_wb()
        y = conv1x1(y, w, b, True)                       # relu1(bn1(conv1(.)))
        w, b = next_wb()
        out = conv3x3(y, w, b, False)                    # conv3 (no relu)
        o_ref[0] = out.astype(o_ref.dtype)

    return kernel


# ---------------------------------------------------------------------------
# Wrapper: weight packing (BN/bias folding, im2col layout) + pallas_call
# ---------------------------------------------------------------------------

def build_forward(num_rdbs, num_convs, H, W):
    HW = H * W
    kernel = _build_fused_kernel(num_rdbs, num_convs, H, W)

    def _fold(bias, bn, cout):
        if bn is None:
            return jnp.ones((cout,), jnp.float32), bias
        gamma, beta, mean, var = bn
        s = gamma * jax.lax.rsqrt(var + 1e-5)            # BatchNorm2d eps
        return s, beta + s * (bias - mean)

    def _pack3x3(w, bias, bn=None):
        # w: (3, 3, Cin, Cout) HWIO -> (Cout, 9*Cin), tap-major (matches _TAPS).
        cout = w.shape[-1]
        s, sh = _fold(bias, bn, cout)
        wk = jnp.transpose(w * s, (3, 0, 1, 2)).reshape(cout, -1)
        return wk, sh.reshape(cout, 1)

    def _pack1x1(w, bias, bn=None):
        # w: (Cin, Cout) -> (Cout, Cin)
        cout = w.shape[-1]
        s, sh = _fold(bias, bn, cout)
        return (w * s).T, sh.reshape(cout, 1)

    @jax.jit
    def forward(params, x_nchw):
        N, in_ch = x_nchw.shape[0], x_nchw.shape[1]
        out_ch = params["conv3"][0].shape[-1]

        # Pad input channels up to a multiple of 8 so all in-kernel sublane
        # concats (im2col stack, dense-feature slab) are tile-aligned.
        cpad = (-in_ch) % 8
        x_in = x_nchw
        w_in, b_in = params["convin"]
        if cpad:
            x_in = jnp.pad(x_in, ((0, 0), (0, cpad), (0, 0), (0, 0)))
            w_in = jnp.pad(w_in, ((0, 0), (0, 0), (0, cpad), (0, 0)))
        cin_k = in_ch + cpad

        # Boundary-validity masks for the 9 taps (tiny constant, folded by XLA).
        pos = jnp.arange(HW)
        hh, ww = pos // W, pos % W
        masks = jnp.stack([
            ((hh + dh >= 0) & (hh + dh < H) & (ww + dw >= 0) & (ww + dw < W))
            for dh, dw in _TAPS
        ]).astype(jnp.float32).reshape(9, 1, HW)

        args = [x_in.reshape(N, cin_k, HW), masks]
        args += _pack3x3(w_in, b_in)
        for rdb in params["rdbs"]:
            for (w, b), bn in zip(rdb["convs"], rdb["bns"]):
                args += _pack3x3(w, b, bn)
            args += _pack1x1(*rdb["conv1"])
        args += _pack1x1(*params["conv1"], bn=params["bn1"])
        args += _pack3x3(*params["conv3"])

        in_specs = [pl.BlockSpec((1, cin_k, HW), lambda n: (n, 0, 0)),
                    pl.BlockSpec((9, 1, HW), lambda n: (0, 0, 0))]
        in_specs += [pl.BlockSpec(a.shape, lambda n: (0, 0)) for a in args[2:]]

        out = pl.pallas_call(
            kernel,
            out_shape=jax.ShapeDtypeStruct((N, out_ch, HW), x_nchw.dtype),
            grid=(N,),
            in_specs=in_specs,
            out_specs=pl.BlockSpec((1, out_ch, HW), lambda n: (n, 0, 0)),
            compiler_params=pltpu.CompilerParams(
                dimension_semantics=("parallel",)),
        )(*args)
        return out.reshape(N, out_ch, H, W)

    return forward


# ---------------------------------------------------------------------------
# Parameter construction (deterministic, in-script)
# ---------------------------------------------------------------------------

def _init_conv(key, kh, kw, cin, cout):
    kw_, kb_ = jax.random.split(key)
    fan_in = kh * kw * cin
    w = jax.random.normal(kw_, (kh, kw, cin, cout), jnp.float32) / jnp.sqrt(float(fan_in))
    b = 0.05 * jax.random.normal(kb_, (cout,), jnp.float32)
    if kh == 1 and kw == 1:
        w = w.reshape(cin, cout)
    return w, b


def _init_bn(key, c):
    k1, k2, k3, k4 = jax.random.split(key, 4)
    gamma = 1.0 + 0.1 * jax.random.normal(k1, (c,), jnp.float32)
    beta = 0.1 * jax.random.normal(k2, (c,), jnp.float32)
    mean = 0.1 * jax.random.normal(k3, (c,), jnp.float32)
    var = 1.0 + 0.1 * jnp.abs(jax.random.normal(k4, (c,), jnp.float32))
    return gamma, beta, mean, var


def make_params(key, num_rdbs, num_convs, in_ch, rdb_ch, inter_ch, out_ch):
    keys = iter(jax.random.split(key, 4 + num_rdbs * (2 * num_convs + 1)))
    p = {}
    p["convin"] = _init_conv(next(keys), 3, 3, in_ch, rdb_ch)
    p["rdbs"] = []
    for _ in range(num_rdbs):
        rdb = {"convs": [], "bns": []}
        for i in range(num_convs):
            rdb["convs"].append(_init_conv(next(keys), 3, 3, (i + 1) * rdb_ch, rdb_ch))
            rdb["bns"].append(_init_bn(next(keys), rdb_ch))
        rdb["conv1"] = _init_conv(next(keys), 1, 1, (num_convs + 1) * rdb_ch, rdb_ch)
        p["rdbs"].append(rdb)
    p["conv1"] = _init_conv(next(keys), 1, 1, num_rdbs * rdb_ch, inter_ch)
    p["bn1"] = _init_bn(next(keys), inter_ch)
    p["conv3"] = _init_conv(next(keys), 3, 3, inter_ch, out_ch)
    return p


# ---------------------------------------------------------------------------
# Pure-JAX (XLA conv) reference for correctness checking
# ---------------------------------------------------------------------------

def ref_forward(params, x):
    def conv(x, w, b, pad):
        out = jax.lax.conv_general_dilated(
            x, w, (1, 1), pad, dimension_numbers=("NCHW", "HWIO", "NCHW"))
        return out + b.reshape(1, -1, 1, 1)

    def conv1x1(x, w, b):
        return conv(x, w.reshape(1, 1, *w.shape), b, "VALID")

    def bn(x, gamma, beta, mean, var, eps=1e-5):
        s = gamma * jax.lax.rsqrt(var + eps)
        return (x - mean.reshape(1, -1, 1, 1)) * s.reshape(1, -1, 1, 1) \
            + beta.reshape(1, -1, 1, 1)

    relu = lambda v: jnp.maximum(v, 0.0)

    w, b = params["convin"]
    x = relu(conv(x, w, b, "SAME"))
    feats = []
    for rdb in params["rdbs"]:
        y = x
        for (w, b), bnp in zip(rdb["convs"], rdb["bns"]):
            x = jnp.concatenate([x, relu(bn(conv(x, w, b, "SAME"), *bnp))], axis=1)
        w1, b1 = rdb["conv1"]
        x = y + relu(conv1x1(x, w1, b1))
        feats.append(x)
    y = jnp.concatenate(feats, axis=1) if len(feats) > 1 else feats[0]
    w1, b1 = params["conv1"]
    y = relu(bn(conv1x1(y, w1, b1), *params["bn1"]))
    w3, b3 = params["conv3"]
    return conv(y, w3, b3, "SAME")


# ---------------------------------------------------------------------------
# Main
# ---------------------------------------------------------------------------

if __name__ == "__main__":
    key = jax.random.PRNGKey(0)
    kp, kx = jax.random.split(key)

    # ResDenseNet(num_rdbs=2, num_convs=2, in_channels=4, rdb_channels=8,
    #             inter_channels=16, out_channels=4)
    num_rdbs, num_convs = 2, 2
    in_ch, rdb_ch, inter_ch, out_ch = 4, 8, 16, 4
    N, H, W = 2, 16, 16

    params = make_params(kp, num_rdbs, num_convs, in_ch, rdb_ch, inter_ch, out_ch)
    x = jax.random.normal(kx, (N, in_ch, H, W), jnp.float32)     # NCHW like PyTorch

    forward = build_forward(num_rdbs, num_convs, H, W)
    out = forward(params, x)
    jax.block_until_ready(out)

    assert out.shape == (N, out_ch, H, W), out.shape
    assert bool(jnp.all(jnp.isfinite(out)))

    # Cross-check the fused Pallas kernel against a plain-JAX reference.
    ref = ref_forward(params, x)
    max_err = float(jnp.max(jnp.abs(out - ref)))
    assert bool(jnp.allclose(out, ref, atol=2e-3, rtol=2e-3)), max_err

    print("KERNEL_OK")
</pallas_src>

<mosaic_0001>
module attributes {stable_mosaic.version = 11 : i64} {
  func.func @kernel(%arg0: i32, %arg1: memref<1x8x256xf32, #tpu.memory_space<vmem>>, %arg2: memref<9x1x256xf32, #tpu.memory_space<vmem>>, %arg3: memref<8x72xf32, #tpu.memory_space<vmem>>, %arg4: memref<8x1xf32, #tpu.memory_space<vmem>>, %arg5: memref<8x72xf32, #tpu.memory_space<vmem>>, %arg6: memref<8x1xf32, #tpu.memory_space<vmem>>, %arg7: memref<8x144xf32, #tpu.memory_space<vmem>>, %arg8: memref<8x1xf32, #tpu.memory_space<vmem>>, %arg9: memref<8x24xf32, #tpu.memory_space<vmem>>, %arg10: memref<8x1xf32, #tpu.memory_space<vmem>>, %arg11: memref<8x72xf32, #tpu.memory_space<vmem>>, %arg12: memref<8x1xf32, #tpu.memory_space<vmem>>, %arg13: memref<8x144xf32, #tpu.memory_space<vmem>>, %arg14: memref<8x1xf32, #tpu.memory_space<vmem>>, %arg15: memref<8x24xf32, #tpu.memory_space<vmem>>, %arg16: memref<8x1xf32, #tpu.memory_space<vmem>>, %arg17: memref<16x16xf32, #tpu.memory_space<vmem>>, %arg18: memref<16x1xf32, #tpu.memory_space<vmem>>, %arg19: memref<4x144xf32, #tpu.memory_space<vmem>>, %arg20: memref<4x1xf32, #tpu.memory_space<vmem>>, %arg21: memref<1x4x256xf32, #tpu.memory_space<vmem>>) attributes {dimension_semantics = [#tpu.dimension_semantics<parallel>], iteration_bounds = array<i64: 2>, scalar_prefetch = 0 : i64, scratch_operands = 0 : i64, tpu.core_type = #tpu.core_type<tc>, window_params = [{transform_indices = @transform_0, window_bounds = array<i64: 1, 8, 256>}, {pipeline_mode = #tpu.pipeline_mode<synchronous>, transform_indices = @transform_1, window_bounds = array<i64: 9, 1, 256>}, {pipeline_mode = #tpu.pipeline_mode<synchronous>, transform_indices = @transform_2, window_bounds = array<i64: 8, 72>}, {pipeline_mode = #tpu.pipeline_mode<synchronous>, transform_indices = @transform_3, window_bounds = array<i64: 8, 1>}, {pipeline_mode = #tpu.pipeline_mode<synchronous>, transform_indices = @transform_4, window_bounds = array<i64: 8, 72>}, {pipeline_mode = #tpu.pipeline_mode<synchronous>, transform_indices = @transform_5, window_bounds = array<i64: 8, 1>}, {pipeline_mode = #tpu.pipeline_mode<synchronous>, transform_indices = @transform_6, window_bounds = array<i64: 8, 144>}, {pipeline_mode = #tpu.pipeline_mode<synchronous>, transform_indices = @transform_7, window_bounds = array<i64: 8, 1>}, {pipeline_mode = #tpu.pipeline_mode<synchronous>, transform_indices = @transform_8, window_bounds = array<i64: 8, 24>}, {pipeline_mode = #tpu.pipeline_mode<synchronous>, transform_indices = @transform_9, window_bounds = array<i64: 8, 1>}, {pipeline_mode = #tpu.pipeline_mode<synchronous>, transform_indices = @transform_10, window_bounds = array<i64: 8, 72>}, {pipeline_mode = #tpu.pipeline_mode<synchronous>, transform_indices = @transform_11, window_bounds = array<i64: 8, 1>}, {pipeline_mode = #tpu.pipeline_mode<synchronous>, transform_indices = @transform_12, window_bounds = array<i64: 8, 144>}, {pipeline_mode = #tpu.pipeline_mode<synchronous>, transform_indices = @transform_13, window_bounds = array<i64: 8, 1>}, {pipeline_mode = #tpu.pipeline_mode<synchronous>, transform_indices = @transform_14, window_bounds = array<i64: 8, 24>}, {pipeline_mode = #tpu.pipeline_mode<synchronous>, transform_indices = @transform_15, window_bounds = array<i64: 8, 1>}, {pipeline_mode = #tpu.pipeline_mode<synchronous>, transform_indices = @transform_16, window_bounds = array<i64: 16, 16>}, {pipeline_mode = #tpu.pipeline_mode<synchronous>, transform_indices = @transform_17, window_bounds = array<i64: 16, 1>}, {pipeline_mode = #tpu.pipeline_mode<synchronous>, transform_indices = @transform_18, window_bounds = array<i64: 4, 144>}, {pipeline_mode = #tpu.pipeline_mode<synchronous>, transform_indices = @transform_19, window_bounds = array<i64: 4, 1>}, {transform_indices = @transform_20, window_bounds = array<i64: 1, 4, 256>}]} {
    %c0 = arith.constant 0 : index
    %c0_0 = arith.constant 0 : index
    %c0_1 = arith.constant 0 : index
    %0 = vector.load %arg1[%c0, %c0_0, %c0_1] : memref<1x8x256xf32, #tpu.memory_space<vmem>>, vector<1x8x256xf32>
    %1 = vector.shape_cast %0 : vector<1x8x256xf32> to vector<8x256xf32>
    %c0_2 = arith.constant 0 : index
    %c0_3 = arith.constant 0 : index
    %2 = vector.load %arg3[%c0_2, %c0_3] : memref<8x72xf32, #tpu.memory_space<vmem>>, vector<8x72xf32>
    %c0_4 = arith.constant 0 : index
    %c0_5 = arith.constant 0 : index
    %3 = vector.load %arg4[%c0_4, %c0_5] : memref<8x1xf32, #tpu.memory_space<vmem>>, vector<8x1xf32>
    %c17_i32 = arith.constant 17 : i32
    %4 = tpu.dynamic_rotate %1 by %c17_i32 dim 1 : vector<8x256xf32>, i32 -> vector<8x256xf32>
    %c0_6 = arith.constant 0 : index
    %c0_7 = arith.constant 0 : index
    %c0_8 = arith.constant 0 : index
    %5 = vector.load %arg2[%c0_6, %c0_7, %c0_8] : memref<9x1x256xf32, #tpu.memory_space<vmem>>, vector<1x1x256xf32>
    %6 = vector.shape_cast %5 : vector<1x1x256xf32> to vector<1x256xf32>
    %7 = vector.broadcast %6 : vector<1x256xf32> to vector<8x256xf32>
    %8 = arith.mulf %4, %7 : vector<8x256xf32>
    %c16_i32 = arith.constant 16 : i32
    %9 = tpu.dynamic_rotate %1 by %c16_i32 dim 1 : vector<8x256xf32>, i32 -> vector<8x256xf32>
    %c1 = arith.constant 1 : index
    %c0_9 = arith.constant 0 : index
    %c0_10 = arith.constant 0 : index
    %10 = vector.load %arg2[%c1, %c0_9, %c0_10] : memref<9x1x256xf32, #tpu.memory_space<vmem>>, vector<1x1x256xf32>
    %11 = vector.shape_cast %10 : vector<1x1x256xf32> to vector<1x256xf32>
    %12 = vector.broadcast %11 : vector<1x256xf32> to vector<8x256xf32>
    %13 = arith.mulf %9, %12 : vector<8x256xf32>
    %c15_i32 = arith.constant 15 : i32
    %14 = tpu.dynamic_rotate %1 by %c15_i32 dim 1 : vector<8x256xf32>, i32 -> vector<8x256xf32>
    %c2 = arith.constant 2 : index
    %c0_11 = arith.constant 0 : index
    %c0_12 = arith.constant 0 : index
    %15 = vector.load %arg2[%c2, %c0_11, %c0_12] : memref<9x1x256xf32, #tpu.memory_space<vmem>>, vector<1x1x256xf32>
    %16 = vector.shape_cast %15 : vector<1x1x256xf32> to vector<1x256xf32>
    %17 = vector.broadcast %16 : vector<1x256xf32> to vector<8x256xf32>
    %18 = arith.mulf %14, %17 : vector<8x256xf32>
    %c1_i32 = arith.constant 1 : i32
    %19 = tpu.dynamic_rotate %1 by %c1_i32 dim 1 : vector<8x256xf32>, i32 -> vector<8x256xf32>
    %c3 = arith.constant 3 : index
    %c0_13 = arith.constant 0 : index
    %c0_14 = arith.constant 0 : index
    %20 = vector.load %arg2[%c3, %c0_13, %c0_14] : memref<9x1x256xf32, #tpu.memory_space<vmem>>, vector<1x1x256xf32>
    %21 = vector.shape_cast %20 : vector<1x1x256xf32> to vector<1x256xf32>
    %22 = vector.broadcast %21 : vector<1x256xf32> to vector<8x256xf32>
    %23 = arith.mulf %19, %22 : vector<8x256xf32>
    %c255_i32 = arith.constant 255 : i32
    %24 = tpu.dynamic_rotate %1 by %c255_i32 dim 1 : vector<8x256xf32>, i32 -> vector<8x256xf32>
    %c5 = arith.constant 5 : index
    %c0_15 = arith.constant 0 : index
    %c0_16 = arith.constant 0 : index
    %25 = vector.load %arg2[%c5, %c0_15, %c0_16] : memref<9x1x256xf32, #tpu.memory_space<vmem>>, vector<1x1x256xf32>
    %26 = vector.shape_cast %25 : vector<1x1x256xf32> to vector<1x256xf32>
    %27 = vector.broadcast %26 : vector<1x256xf32> to vector<8x256xf32>
    %28 = arith.mulf %24, %27 : vector<8x256xf32>
    %c241_i32 = arith.constant 241 : i32
    %29 = tpu.dynamic_rotate %1 by %c241_i32 dim 1 : vector<8x256xf32>, i32 -> vector<8x256xf32>
    %c6 = arith.constant 6 : index
    %c0_17 = arith.constant 0 : index
    %c0_18 = arith.constant 0 : index
    %30 = vector.load %arg2[%c6, %c0_17, %c0_18] : memref<9x1x256xf32, #tpu.memory_space<vmem>>, vector<1x1x256xf32>
    %31 = vector.shape_cast %30 : vector<1x1x256xf32> to vector<1x256xf32>
    %32 = vector.broadcast %31 : vector<1x256xf32> to vector<8x256xf32>
    %33 = arith.mulf %29, %32 : vector<8x256xf32>
    %c240_i32 = arith.constant 240 : i32
    %34 = tpu.dynamic_rotate %1 by %c240_i32 dim 1 : vector<8x256xf32>, i32 -> vector<8x256xf32>
    %c7 = arith.constant 7 : index
    %c0_19 = arith.constant 0 : index
    %c0_20 = arith.constant 0 : index
    %35 = vector.load %arg2[%c7, %c0_19, %c0_20] : memref<9x1x256xf32, #tpu.memory_space<vmem>>, vector<1x1x256xf32>
    %36 = vector.shape_cast %35 : vector<1x1x256xf32> to vector<1x256xf32>
    %37 = vector.broadcast %36 : vector<1x256xf32> to vector<8x256xf32>
    %38 = arith.mulf %34, %37 : vector<8x256xf32>
    %c239_i32 = arith.constant 239 : i32
    %39 = tpu.dynamic_rotate %1 by %c239_i32 dim 1 : vector<8x256xf32>, i32 -> vector<8x256xf32>
    %c8 = arith.constant 8 : index
    %c0_21 = arith.constant 0 : index
    %c0_22 = arith.constant 0 : index
    %40 = vector.load %arg2[%c8, %c0_21, %c0_22] : memref<9x1x256xf32, #tpu.memory_space<vmem>>, vector<1x1x256xf32>
    %41 = vector.shape_cast %40 : vector<1x1x256xf32> to vector<1x256xf32>
    %42 = vector.broadcast %41 : vector<1x256xf32> to vector<8x256xf32>
    %43 = arith.mulf %39, %42 : vector<8x256xf32>
    %44 = tpu.concatenate %8, %13, %18, %23, %1, %28, %33, %38, %43 in 0 : vector<8x256xf32>, vector<8x256xf32>, vector<8x256xf32>, vector<8x256xf32>, vector<8x256xf32>, vector<8x256xf32>, vector<8x256xf32>, vector<8x256xf32>, vector<8x256xf32> -> vector<72x256xf32>
    %cst = arith.constant dense<0.000000e+00> : vector<8x256xf32>
    %45 = tpu.matmul %2, %44, %cst {dimension_numbers = #tpu.dot_dimension_numbers<[1], [0], [0], [1], [0, 0, 1, 1], [], []>} : vector<8x72xf32>, vector<72x256xf32>, vector<8x256xf32> -> vector<8x256xf32>
    %46 = vector.broadcast %3 : vector<8x1xf32> to vector<8x256xf32>
    %47 = arith.addf %45, %46 : vector<8x256xf32>
    %cst_23 = arith.constant 0.000000e+00 : f32
    %48 = vector.broadcast %cst_23 : f32 to vector<8x256xf32>
    %49 = arith.maximumf %47, %48 : vector<8x256xf32>
    %c0_24 = arith.constant 0 : index
    %c0_25 = arith.constant 0 : index
    %50 = vector.load %arg5[%c0_24, %c0_25] : memref<8x72xf32, #tpu.memory_space<vmem>>, vector<8x72xf32>
    %c0_26 = arith.constant 0 : index
    %c0_27 = arith.constant 0 : index
    %51 = vector.load %arg6[%c0_26, %c0_27] : memref<8x1xf32, #tpu.memory_space<vmem>>, vector<8x1xf32>
    %c17_i32_28 = arith.constant 17 : i32
    %52 = tpu.dynamic_rotate %49 by %c17_i32_28 dim 1 : vector<8x256xf32>, i32 -> vector<8x256xf32>
    %c0_29 = arith.constant 0 : index
    %c0_30 = arith.constant 0 : index
    %c0_31 = arith.constant 0 : index
    %53 = vector.load %arg2[%c0_29, %c0_30, %c0_31] : memref<9x1x256xf32, #tpu.memory_space<vmem>>, vector<1x1x256xf32>
    %54 = vector.shape_cast %53 : vector<1x1x256xf32> to vector<1x256xf32>
    %55 = vector.broadcast %54 : vector<1x256xf32> to vector<8x256xf32>
    %56 = arith.mulf %52, %55 : vector<8x256xf32>
    %c16_i32_32 = arith.constant 16 : i32
    %57 = tpu.dynamic_rotate %49 by %c16_i32_32 dim 1 : vector<8x256xf32>, i32 -> vector<8x256xf32>
    %c1_33 = arith.constant 1 : index
    %c0_34 = arith.constant 0 : index
    %c0_35 = arith.constant 0 : index
    %58 = vector.load %arg2[%c1_33, %c0_34, %c0_35] : memref<9x1x256xf32, #tpu.memory_space<vmem>>, vector<1x1x256xf32>
    %59 = vector.shape_cast %58 : vector<1x1x256xf32> to vector<1x256xf32>
    %60 = vector.broadcast %59 : vector<1x256xf32> to vector<8x256xf32>
    %61 = arith.mulf %57, %60 : vector<8x256xf32>
    %c15_i32_36 = arith.constant 15 : i32
    %62 = tpu.dynamic_rotate %49 by %c15_i32_36 dim 1 : vector<8x256xf32>, i32 -> vector<8x256xf32>
    %c2_37 = arith.constant 2 : index
    %c0_38 = arith.constant 0 : index
    %c0_39 = arith.constant 0 : index
    %63 = vector.load %arg2[%c2_37, %c0_38, %c0_39] : memref<9x1x256xf32, #tpu.memory_space<vmem>>, vector<1x1x256xf32>
    %64 = vector.shape_cast %63 : vector<1x1x256xf32> to vector<1x256xf32>
    %65 = vector.broadcast %64 : vector<1x256xf32> to vector<8x256xf32>
    %66 = arith.mulf %62, %65 : vector<8x256xf32>
    %c1_i32_40 = arith.constant 1 : i32
    %67 = tpu.dynamic_rotate %49 by %c1_i32_40 dim 1 : vector<8x256xf32>, i32 -> vector<8x256xf32>
    %c3_41 = arith.constant 3 : index
    %c0_42 = arith.constant 0 : index
    %c0_43 = arith.constant 0 : index
    %68 = vector.load %arg2[%c3_41, %c0_42, %c0_43] : memref<9x1x256xf32, #tpu.memory_space<vmem>>, vector<1x1x256xf32>
    %69 = vector.shape_cast %68 : vector<1x1x256xf32> to vector<1x256xf32>
    %70 = vector.broadcast %69 : vector<1x256xf32> to vector<8x256xf32>
    %71 = arith.mulf %67, %70 : vector<8x256xf32>
    %c255_i32_44 = arith.constant 255 : i32
    %72 = tpu.dynamic_rotate %49 by %c255_i32_44 dim 1 : vector<8x256xf32>, i32 -> vector<8x256xf32>
    %c5_45 = arith.constant 5 : index
    %c0_46 = arith.constant 0 : index
    %c0_47 = arith.constant 0 : index
    %73 = vector.load %arg2[%c5_45, %c0_46, %c0_47] : memref<9x1x256xf32, #tpu.memory_space<vmem>>, vector<1x1x256xf32>
    %74 = vector.shape_cast %73 : vector<1x1x256xf32> to vector<1x256xf32>
    %75 = vector.broadcast %74 : vector<1x256xf32> to vector<8x256xf32>
    %76 = arith.mulf %72, %75 : vector<8x256xf32>
    %c241_i32_48 = arith.constant 241 : i32
    %77 = tpu.dynamic_rotate %49 by %c241_i32_48 dim 1 : vector<8x256xf32>, i32 -> vector<8x256xf32>
    %c6_49 = arith.constant 6 : index
    %c0_50 = arith.constant 0 : index
    %c0_51 = arith.constant 0 : index
    %78 = vector.load %arg2[%c6_49, %c0_50, %c0_51] : memref<9x1x256xf32, #tpu.memory_space<vmem>>, vector<1x1x256xf32>
    %79 = vector.shape_cast %78 : vector<1x1x256xf32> to vector<1x256xf32>
    %80 = vector.broadcast %79 : vector<1x256xf32> to vector<8x256xf32>
    %81 = arith.mulf %77, %80 : vector<8x256xf32>
    %c240_i32_52 = arith.constant 240 : i32
    %82 = tpu.dynamic_rotate %49 by %c240_i32_52 dim 1 : vector<8x256xf32>, i32 -> vector<8x256xf32>
    %c7_53 = arith.constant 7 : index
    %c0_54 = arith.constant 0 : index
    %c0_55 = arith.constant 0 : index
    %83 = vector.load %arg2[%c7_53, %c0_54, %c0_55] : memref<9x1x256xf32, #tpu.memory_space<vmem>>, vector<1x1x256xf32>
    %84 = vector.shape_cast %83 : vector<1x1x256xf32> to vector<1x256xf32>
    %85 = vector.broadcast %84 : vector<1x256xf32> to vector<8x256xf32>
    %86 = arith.mulf %82, %85 : vector<8x256xf32>
    %c239_i32_56 = arith.constant 239 : i32
    %87 = tpu.dynamic_rotate %49 by %c239_i32_56 dim 1 : vector<8x256xf32>, i32 -> vector<8x256xf32>
    %c8_57 = arith.constant 8 : index
    %c0_58 = arith.constant 0 : index
    %c0_59 = arith.constant 0 : index
    %88 = vector.load %arg2[%c8_57, %c0_58, %c0_59] : memref<9x1x256xf32, #tpu.memory_space<vmem>>, vector<1x1x256xf32>
    %89 = vector.shape_cast %88 : vector<1x1x256xf32> to vector<1x256xf32>
    %90 = vector.broadcast %89 : vector<1x256xf32> to vector<8x256xf32>
    %91 = arith.mulf %87, %90 : vector<8x256xf32>
    %92 = tpu.concatenate %56, %61, %66, %71, %49, %76, %81, %86, %91 in 0 : vector<8x256xf32>, vector<8x256xf32>, vector<8x256xf32>, vector<8x256xf32>, vector<8x256xf32>, vector<8x256xf32>, vector<8x256xf32>, vector<8x256xf32>, vector<8x256xf32> -> vector<72x256xf32>
    %cst_60 = arith.constant dense<0.000000e+00> : vector<8x256xf32>
    %93 = tpu.matmul %50, %92, %cst_60 {dimension_numbers = #tpu.dot_dimension_numbers<[1], [0], [0], [1], [0, 0, 1, 1], [], []>} : vector<8x72xf32>, vector<72x256xf32>, vector<8x256xf32> -> vector<8x256xf32>
    %94 = vector.broadcast %51 : vector<8x1xf32> to vector<8x256xf32>
    %95 = arith.addf %93, %94 : vector<8x256xf32>
    %cst_61 = arith.constant 0.000000e+00 : f32
    %96 = vector.broadcast %cst_61 : f32 to vector<8x256xf32>
    %97 = arith.maximumf %95, %96 : vector<8x256xf32>
    %98 = tpu.concatenate %49, %97 in 0 : vector<8x256xf32>, vector<8x256xf32> -> vector<16x256xf32>
    %c0_62 = arith.constant 0 : index
    %c0_63 = arith.constant 0 : index
    %99 = vector.load %arg7[%c0_62, %c0_63] : memref<8x144xf32, #tpu.memory_space<vmem>>, vector<8x144xf32>
    %c0_64 = arith.constant 0 : index
    %c0_65 = arith.constant 0 : index
    %100 = vector.load %arg8[%c0_64, %c0_65] : memref<8x1xf32, #tpu.memory_space<vmem>>, vector<8x1xf32>
    %c17_i32_66 = arith.constant 17 : i32
    %101 = tpu.dynamic_rotate %98 by %c17_i32_66 dim 1 : vector<16x256xf32>, i32 -> vector<16x256xf32>
    %c0_67 = arith.constant 0 : index
    %c0_68 = arith.constant 0 : index
    %c0_69 = arith.constant 0 : index
    %102 = vector.load %arg2[%c0_67, %c0_68, %c0_69] : memref<9x1x256xf32, #tpu.memory_space<vmem>>, vector<1x1x256xf32>
    %103 = vector.shape_cast %102 : vector<1x1x256xf32> to vector<1x256xf32>
    %104 = vector.broadcast %103 : vector<1x256xf32> to vector<16x256xf32>
    %105 = arith.mulf %101, %104 : vector<16x256xf32>
    %c16_i32_70 = arith.constant 16 : i32
    %106 = tpu.dynamic_rotate %98 by %c16_i32_70 dim 1 : vector<16x256xf32>, i32 -> vector<16x256xf32>
    %c1_71 = arith.constant 1 : index
    %c0_72 = arith.constant 0 : index
    %c0_73 = arith.constant 0 : index
    %107 = vector.load %arg2[%c1_71, %c0_72, %c0_73] : memref<9x1x256xf32, #tpu.memory_space<vmem>>, vector<1x1x256xf32>
    %108 = vector.shape_cast %107 : vector<1x1x256xf32> to vector<1x256xf32>
    %109 = vector.broadcast %108 : vector<1x256xf32> to vector<16x256xf32>
    %110 = arith.mulf %106, %109 : vector<16x256xf32>
    %c15_i32_74 = arith.constant 15 : i32
    %111 = tpu.dynamic_rotate %98 by %c15_i32_74 dim 1 : vector<16x256xf32>, i32 -> vector<16x256xf32>
    %c2_75 = arith.constant 2 : index
    %c0_76 = arith.constant 0 : index
    %c0_77 = arith.constant 0 : index
    %112 = vector.load %arg2[%c2_75, %c0_76, %c0_77] : memref<9x1x256xf32, #tpu.memory_space<vmem>>, vector<1x1x256xf32>
    %113 = vector.shape_cast %112 : vector<1x1x256xf32> to vector<1x256xf32>
    %114 = vector.broadcast %113 : vector<1x256xf32> to vector<16x256xf32>
    %115 = arith.mulf %111, %114 : vector<16x256xf32>
    %c1_i32_78 = arith.constant 1 : i32
    %116 = tpu.dynamic_rotate %98 by %c1_i32_78 dim 1 : vector<16x256xf32>, i32 -> vector<16x256xf32>
    %c3_79 = arith.constant 3 : index
    %c0_80 = arith.constant 0 : index
    %c0_81 = arith.constant 0 : index
    %117 = vector.load %arg2[%c3_79, %c0_80, %c0_81] : memref<9x1x256xf32, #tpu.memory_space<vmem>>, vector<1x1x256xf32>
    %118 = vector.shape_cast %117 : vector<1x1x256xf32> to vector<1x256xf32>
    %119 = vector.broadcast %118 : vector<1x256xf32> to vector<16x256xf32>
    %120 = arith.mulf %116, %119 : vector<16x256xf32>
    %c255_i32_82 = arith.constant 255 : i32
    %121 = tpu.dynamic_rotate %98 by %c255_i32_82 dim 1 : vector<16x256xf32>, i32 -> vector<16x256xf32>
    %c5_83 = arith.constant 5 : index
    %c0_84 = arith.constant 0 : index
    %c0_85 = arith.constant 0 : index
    %122 = vector.load %arg2[%c5_83, %c0_84, %c0_85] : memref<9x1x256xf32, #tpu.memory_space<vmem>>, vector<1x1x256xf32>
    %123 = vector.shape_cast %122 : vector<1x1x256xf32> to vector<1x256xf32>
    %124 = vector.broadcast %123 : vector<1x256xf32> to vector<16x256xf32>
    %125 = arith.mulf %121, %124 : vector<16x256xf32>
    %c241_i32_86 = arith.constant 241 : i32
    %126 = tpu.dynamic_rotate %98 by %c241_i32_86 dim 1 : vector<16x256xf32>, i32 -> vector<16x256xf32>
    %c6_87 = arith.constant 6 : index
    %c0_88 = arith.constant 0 : index
    %c0_89 = arith.constant 0 : index
    %127 = vector.load %arg2[%c6_87, %c0_88, %c0_89] : memref<9x1x256xf32, #tpu.memory_space<vmem>>, vector<1x1x256xf32>
    %128 = vector.shape_cast %127 : vector<1x1x256xf32> to vector<1x256xf32>
    %129 = vector.broadcast %128 : vector<1x256xf32> to vector<16x256xf32>
    %130 = arith.mulf %126, %129 : vector<16x256xf32>
    %c240_i32_90 = arith.constant 240 : i32
    %131 = tpu.dynamic_rotate %98 by %c240_i32_90 dim 1 : vector<16x256xf32>, i32 -> vector<16x256xf32>
    %c7_91 = arith.constant 7 : index
    %c0_92 = arith.constant 0 : index
    %c0_93 = arith.constant 0 : index
    %132 = vector.load %arg2[%c7_91, %c0_92, %c0_93] : memref<9x1x256xf32, #tpu.memory_space<vmem>>, vector<1x1x256xf32>
    %133 = vector.shape_cast %132 : vector<1x1x256xf32> to vector<1x256xf32>
    %134 = vector.broadcast %133 : vector<1x256xf32> to vector<16x256xf32>
    %135 = arith.mulf %131, %134 : vector<16x256xf32>
    %c239_i32_94 = arith.constant 239 : i32
    %136 = tpu.dynamic_rotate %98 by %c239_i32_94 dim 1 : vector<16x256xf32>, i32 -> vector<16x256xf32>
    %c8_95 = arith.constant 8 : index
    %c0_96 = arith.constant 0 : index
    %c0_97 = arith.constant 0 : index
    %137 = vector.load %arg2[%c8_95, %c0_96, %c0_97] : memref<9x1x256xf32, #tpu.memory_space<vmem>>, vector<1x1x256xf32>
    %138 = vector.shape_cast %137 : vector<1x1x256xf32> to vector<1x256xf32>
    %139 = vector.broadcast %138 : vector<1x256xf32> to vector<16x256xf32>
    %140 = arith.mulf %136, %139 : vector<16x256xf32>
    %141 = tpu.concatenate %105, %110, %115, %120, %98, %125, %130, %135, %140 in 0 : vector<16x256xf32>, vector<16x256xf32>, vector<16x256xf32>, vector<16x256xf32>, vector<16x256xf32>, vector<16x256xf32>, vector<16x256xf32>, vector<16x256xf32>, vector<16x256xf32> -> vector<144x256xf32>
    %cst_98 = arith.constant dense<0.000000e+00> : vector<8x256xf32>
    %142 = tpu.matmul %99, %141, %cst_98 {dimension_numbers = #tpu.dot_dimension_numbers<[1], [0], [0], [1], [0, 0, 1, 1], [], []>} : vector<8x144xf32>, vector<144x256xf32>, vector<8x256xf32> -> vector<8x256xf32>
    %143 = vector.broadcast %100 : vector<8x1xf32> to vector<8x256xf32>
    %144 = arith.addf %142, %143 : vector<8x256xf32>
    %cst_99 = arith.constant 0.000000e+00 : f32
    %145 = vector.broadcast %cst_99 : f32 to vector<8x256xf32>
    %146 = arith.maximumf %144, %145 : vector<8x256xf32>
    %147 = tpu.concatenate %98, %146 in 0 : vector<16x256xf32>, vector<8x256xf32> -> vector<24x256xf32>
    %c0_100 = arith.constant 0 : index
    %c0_101 = arith.constant 0 : index
    %148 = vector.load %arg9[%c0_100, %c0_101] : memref<8x24xf32, #tpu.memory_space<vmem>>, vector<8x24xf32>
    %c0_102 = arith.constant 0 : index
    %c0_103 = arith.constant 0 : index
    %149 = vector.load %arg10[%c0_102, %c0_103] : memref<8x1xf32, #tpu.memory_space<vmem>>, vector<8x1xf32>
    %cst_104 = arith.constant dense<0.000000e+00> : vector<8x256xf32>
    %150 = tpu.matmul %148, %147, %cst_104 {dimension_numbers = #tpu.dot_dimension_numbers<[1], [0], [0], [1], [0, 0, 1, 1], [], []>} : vector<8x24xf32>, vector<24x256xf32>, vector<8x256xf32> -> vector<8x256xf32>
    %151 = vector.broadcast %149 : vector<8x1xf32> to vector<8x256xf32>
    %152 = arith.addf %150, %151 : vector<8x256xf32>
    %cst_105 = arith.constant 0.000000e+00 : f32
    %153 = vector.broadcast %cst_105 : f32 to vector<8x256xf32>
    %154 = arith.maximumf %152, %153 : vector<8x256xf32>
    %155 = arith.addf %49, %154 : vector<8x256xf32>
    %c0_106 = arith.constant 0 : index
    %c0_107 = arith.constant 0 : index
    %156 = vector.load %arg11[%c0_106, %c0_107] : memref<8x72xf32, #tpu.memory_space<vmem>>, vector<8x72xf32>
    %c0_108 = arith.constant 0 : index
    %c0_109 = arith.constant 0 : index
    %157 = vector.load %arg12[%c0_108, %c0_109] : memref<8x1xf32, #tpu.memory_space<vmem>>, vector<8x1xf32>
    %c17_i32_110 = arith.constant 17 : i32
    %158 = tpu.dynamic_rotate %155 by %c17_i32_110 dim 1 : vector<8x256xf32>, i32 -> vector<8x256xf32>
    %c0_111 = arith.constant 0 : index
    %c0_112 = arith.constant 0 : index
    %c0_113 = arith.constant 0 : index
    %159 = vector.load %arg2[%c0_111, %c0_112, %c0_113] : memref<9x1x256xf32, #tpu.memory_space<vmem>>, vector<1x1x256xf32>
    %160 = vector.shape_cast %159 : vector<1x1x256xf32> to vector<1x256xf32>
    %161 = vector.broadcast %160 : vector<1x256xf32> to vector<8x256xf32>
    %162 = arith.mulf %158, %161 : vector<8x256xf32>
    %c16_i32_114 = arith.constant 16 : i32
    %163 = tpu.dynamic_rotate %155 by %c16_i32_114 dim 1 : vector<8x256xf32>, i32 -> vector<8x256xf32>
    %c1_115 = arith.constant 1 : index
    %c0_116 = arith.constant 0 : index
    %c0_117 = arith.constant 0 : index
    %164 = vector.load %arg2[%c1_115, %c0_116, %c0_117] : memref<9x1x256xf32, #tpu.memory_space<vmem>>, vector<1x1x256xf32>
    %165 = vector.shape_cast %164 : vector<1x1x256xf32> to vector<1x256xf32>
    %166 = vector.broadcast %165 : vector<1x256xf32> to vector<8x256xf32>
    %167 = arith.mulf %163, %166 : vector<8x256xf32>
    %c15_i32_118 = arith.constant 15 : i32
    %168 = tpu.dynamic_rotate %155 by %c15_i32_118 dim 1 : vector<8x256xf32>, i32 -> vector<8x256xf32>
    %c2_119 = arith.constant 2 : index
    %c0_120 = arith.constant 0 : index
    %c0_121 = arith.constant 0 : index
    %169 = vector.load %arg2[%c2_119, %c0_120, %c0_121] : memref<9x1x256xf32, #tpu.memory_space<vmem>>, vector<1x1x256xf32>
    %170 = vector.shape_cast %169 : vector<1x1x256xf32> to vector<1x256xf32>
    %171 = vector.broadcast %170 : vector<1x256xf32> to vector<8x256xf32>
    %172 = arith.mulf %168, %171 : vector<8x256xf32>
    %c1_i32_122 = arith.constant 1 : i32
    %173 = tpu.dynamic_rotate %155 by %c1_i32_122 dim 1 : vector<8x256xf32>, i32 -> vector<8x256xf32>
    %c3_123 = arith.constant 3 : index
    %c0_124 = arith.constant 0 : index
    %c0_125 = arith.constant 0 : index
    %174 = vector.load %arg2[%c3_123, %c0_124, %c0_125] : memref<9x1x256xf32, #tpu.memory_space<vmem>>, vector<1x1x256xf32>
    %175 = vector.shape_cast %174 : vector<1x1x256xf32> to vector<1x256xf32>
    %176 = vector.broadcast %175 : vector<1x256xf32> to vector<8x256xf32>
    %177 = arith.mulf %173, %176 : vector<8x256xf32>
    %c255_i32_126 = arith.constant 255 : i32
    %178 = tpu.dynamic_rotate %155 by %c255_i32_126 dim 1 : vector<8x256xf32>, i32 -> vector<8x256xf32>
    %c5_127 = arith.constant 5 : index
    %c0_128 = arith.constant 0 : index
    %c0_129 = arith.constant 0 : index
    %179 = vector.load %arg2[%c5_127, %c0_128, %c0_129] : memref<9x1x256xf32, #tpu.memory_space<vmem>>, vector<1x1x256xf32>
    %180 = vector.shape_cast %179 : vector<1x1x256xf32> to vector<1x256xf32>
    %181 = vector.broadcast %180 : vector<1x256xf32> to vector<8x256xf32>
    %182 = arith.mulf %178, %181 : vector<8x256xf32>
    %c241_i32_130 = arith.constant 241 : i32
    %183 = tpu.dynamic_rotate %155 by %c241_i32_130 dim 1 : vector<8x256xf32>, i32 -> vector<8x256xf32>
    %c6_131 = arith.constant 6 : index
    %c0_132 = arith.constant 0 : index
    %c0_133 = arith.constant 0 : index
    %184 = vector.load %arg2[%c6_131, %c0_132, %c0_133] : memref<9x1x256xf32, #tpu.memory_space<vmem>>, vector<1x1x256xf32>
    %185 = vector.shape_cast %184 : vector<1x1x256xf32> to vector<1x256xf32>
    %186 = vector.broadcast %185 : vector<1x256xf32> to vector<8x256xf32>
    %187 = arith.mulf %183, %186 : vector<8x256xf32>
    %c240_i32_134 = arith.constant 240 : i32
    %188 = tpu.dynamic_rotate %155 by %c240_i32_134 dim 1 : vector<8x256xf32>, i32 -> vector<8x256xf32>
    %c7_135 = arith.constant 7 : index
    %c0_136 = arith.constant 0 : index
    %c0_137 = arith.constant 0 : index
    %189 = vector.load %arg2[%c7_135, %c0_136, %c0_137] : memref<9x1x256xf32, #tpu.memory_space<vmem>>, vector<1x1x256xf32>
    %190 = vector.shape_cast %189 : vector<1x1x256xf32> to vector<1x256xf32>
    %191 = vector.broadcast %190 : vector<1x256xf32> to vector<8x256xf32>
    %192 = arith.mulf %188, %191 : vector<8x256xf32>
    %c239_i32_138 = arith.constant 239 : i32
    %193 = tpu.dynamic_rotate %155 by %c239_i32_138 dim 1 : vector<8x256xf32>, i32 -> vector<8x256xf32>
    %c8_139 = arith.constant 8 : index
    %c0_140 = arith.constant 0 : index
    %c0_141 = arith.constant 0 : index
    %194 = vector.load %arg2[%c8_139, %c0_140, %c0_141] : memref<9x1x256xf32, #tpu.memory_space<vmem>>, vector<1x1x256xf32>
    %195 = vector.shape_cast %194 : vector<1x1x256xf32> to vector<1x256xf32>
    %196 = vector.broadcast %195 : vector<1x256xf32> to vector<8x256xf32>
    %197 = arith.mulf %193, %196 : vector<8x256xf32>
    %198 = tpu.concatenate %162, %167, %172, %177, %155, %182, %187, %192, %197 in 0 : vector<8x256xf32>, vector<8x256xf32>, vector<8x256xf32>, vector<8x256xf32>, vector<8x256xf32>, vector<8x256xf32>, vector<8x256xf32>, vector<8x256xf32>, vector<8x256xf32> -> vector<72x256xf32>
    %cst_142 = arith.constant dense<0.000000e+00> : vector<8x256xf32>
    %199 = tpu.matmul %156, %198, %cst_142 {dimension_numbers = #tpu.dot_dimension_numbers<[1], [0], [0], [1], [0, 0, 1, 1], [], []>} : vector<8x72xf32>, vector<72x256xf32>, vector<8x256xf32> -> vector<8x256xf32>
    %200 = vector.broadcast %157 : vector<8x1xf32> to vector<8x256xf32>
    %201 = arith.addf %199, %200 : vector<8x256xf32>
    %cst_143 = arith.constant 0.000000e+00 : f32
    %202 = vector.broadcast %cst_143 : f32 to vector<8x256xf32>
    %203 = arith.maximumf %201, %202 : vector<8x256xf32>
    %204 = tpu.concatenate %155, %203 in 0 : vector<8x256xf32>, vector<8x256xf32> -> vector<16x256xf32>
    %c0_144 = arith.constant 0 : index
    %c0_145 = arith.constant 0 : index
    %205 = vector.load %arg13[%c0_144, %c0_145] : memref<8x144xf32, #tpu.memory_space<vmem>>, vector<8x144xf32>
    %c0_146 = arith.constant 0 : index
    %c0_147 = arith.constant 0 : index
    %206 = vector.load %arg14[%c0_146, %c0_147] : memref<8x1xf32, #tpu.memory_space<vmem>>, vector<8x1xf32>
    %c17_i32_148 = arith.constant 17 : i32
    %207 = tpu.dynamic_rotate %204 by %c17_i32_148 dim 1 : vector<16x256xf32>, i32 -> vector<16x256xf32>
    %c0_149 = arith.constant 0 : index
    %c0_150 = arith.constant 0 : index
    %c0_151 = arith.constant 0 : index
    %208 = vector.load %arg2[%c0_149, %c0_150, %c0_151] : memref<9x1x256xf32, #tpu.memory_space<vmem>>, vector<1x1x256xf32>
    %209 = vector.shape_cast %208 : vector<1x1x256xf32> to vector<1x256xf32>
    %210 = vector.broadcast %209 : vector<1x256xf32> to vector<16x256xf32>
    %211 = arith.mulf %207, %210 : vector<16x256xf32>
    %c16_i32_152 = arith.constant 16 : i32
    %212 = tpu.dynamic_rotate %204 by %c16_i32_152 dim 1 : vector<16x256xf32>, i32 -> vector<16x256xf32>
    %c1_153 = arith.constant 1 : index
    %c0_154 = arith.constant 0 : index
    %c0_155 = arith.constant 0 : index
    %213 = vector.load %arg2[%c1_153, %c0_154, %c0_155] : memref<9x1x256xf32, #tpu.memory_space<vmem>>, vector<1x1x256xf32>
    %214 = vector.shape_cast %213 : vector<1x1x256xf32> to vector<1x256xf32>
    %215 = vector.broadcast %214 : vector<1x256xf32> to vector<16x256xf32>
    %216 = arith.mulf %212, %215 : vector<16x256xf32>
    %c15_i32_156 = arith.constant 15 : i32
    %217 = tpu.dynamic_rotate %204 by %c15_i32_156 dim 1 : vector<16x256xf32>, i32 -> vector<16x256xf32>
    %c2_157 = arith.constant 2 : index
    %c0_158 = arith.constant 0 : index
    %c0_159 = arith.constant 0 : index
    %218 = vector.load %arg2[%c2_157, %c0_158, %c0_159] : memref<9x1x256xf32, #tpu.memory_space<vmem>>, vector<1x1x256xf32>
    %219 = vector.shape_cast %218 : vector<1x1x256xf32> to vector<1x256xf32>
    %220 = vector.broadcast %219 : vector<1x256xf32> to vector<16x256xf32>
    %221 = arith.mulf %217, %220 : vector<16x256xf32>
    %c1_i32_160 = arith.constant 1 : i32
    %222 = tpu.dynamic_rotate %204 by %c1_i32_160 dim 1 : vector<16x256xf32>, i32 -> vector<16x256xf32>
    %c3_161 = arith.constant 3 : index
    %c0_162 = arith.constant 0 : index
    %c0_163 = arith.constant 0 : index
    %223 = vector.load %arg2[%c3_161, %c0_162, %c0_163] : memref<9x1x256xf32, #tpu.memory_space<vmem>>, vector<1x1x256xf32>
    %224 = vector.shape_cast %223 : vector<1x1x256xf32> to vector<1x256xf32>
    %225 = vector.broadcast %224 : vector<1x256xf32> to vector<16x256xf32>
    %226 = arith.mulf %222, %225 : vector<16x256xf32>
    %c255_i32_164 = arith.constant 255 : i32
    %227 = tpu.dynamic_rotate %204 by %c255_i32_164 dim 1 : vector<16x256xf32>, i32 -> vector<16x256xf32>
    %c5_165 = arith.constant 5 : index
    %c0_166 = arith.constant 0 : index
    %c0_167 = arith.constant 0 : index
    %228 = vector.load %arg2[%c5_165, %c0_166, %c0_167] : memref<9x1x256xf32, #tpu.memory_space<vmem>>, vector<1x1x256xf32>
    %229 = vector.shape_cast %228 : vector<1x1x256xf32> to vector<1x256xf32>
    %230 = vector.broadcast %229 : vector<1x256xf32> to vector<16x256xf32>
    %231 = arith.mulf %227, %230 : vector<16x256xf32>
    %c241_i32_168 = arith.constant 241 : i32
    %232 = tpu.dynamic_rotate %204 by %c241_i32_168 dim 1 : vector<16x256xf32>, i32 -> vector<16x256xf32>
    %c6_169 = arith.constant 6 : index
    %c0_170 = arith.constant 0 : index
    %c0_171 = arith.constant 0 : index
    %233 = vector.load %arg2[%c6_169, %c0_170, %c0_171] : memref<9x1x256xf32, #tpu.memory_space<vmem>>, vector<1x1x256xf32>
    %234 = vector.shape_cast %233 : vector<1x1x256xf32> to vector<1x256xf32>
    %235 = vector.broadcast %234 : vector<1x256xf32> to vector<16x256xf32>
    %236 = arith.mulf %232, %235 : vector<16x256xf32>
    %c240_i32_172 = arith.constant 240 : i32
    %237 = tpu.dynamic_rotate %204 by %c240_i32_172 dim 1 : vector<16x256xf32>, i32 -> vector<16x256xf32>
    %c7_173 = arith.constant 7 : index
    %c0_174 = arith.constant 0 : index
    %c0_175 = arith.constant 0 : index
    %238 = vector.load %arg2[%c7_173, %c0_174, %c0_175] : memref<9x1x256xf32, #tpu.memory_space<vmem>>, vector<1x1x256xf32>
    %239 = vector.shape_cast %238 : vector<1x1x256xf32> to vector<1x256xf32>
    %240 = vector.broadcast %239 : vector<1x256xf32> to vector<16x256xf32>
    %241 = arith.mulf %237, %240 : vector<16x256xf32>
    %c239_i32_176 = arith.constant 239 : i32
    %242 = tpu.dynamic_rotate %204 by %c239_i32_176 dim 1 : vector<16x256xf32>, i32 -> vector<16x256xf32>
    %c8_177 = arith.constant 8 : index
    %c0_178 = arith.constant 0 : index
    %c0_179 = arith.constant 0 : index
    %243 = vector.load %arg2[%c8_177, %c0_178, %c0_179] : memref<9x1x256xf32, #tpu.memory_space<vmem>>, vector<1x1x256xf32>
    %244 = vector.shape_cast %243 : vector<1x1x256xf32> to vector<1x256xf32>
    %245 = vector.broadcast %244 : vector<1x256xf32> to vector<16x256xf32>
    %246 = arith.mulf %242, %245 : vector<16x256xf32>
    %247 = tpu.concatenate %211, %216, %221, %226, %204, %231, %236, %241, %246 in 0 : vector<16x256xf32>, vector<16x256xf32>, vector<16x256xf32>, vector<16x256xf32>, vector<16x256xf32>, vector<16x256xf32>, vector<16x256xf32>, vector<16x256xf32>, vector<16x256xf32> -> vector<144x256xf32>
    %cst_180 = arith.constant dense<0.000000e+00> : vector<8x256xf32>
    %248 = tpu.matmul %205, %247, %cst_180 {dimension_numbers = #tpu.dot_dimension_numbers<[1], [0], [0], [1], [0, 0, 1, 1], [], []>} : vector<8x144xf32>, vector<144x256xf32>, vector<8x256xf32> -> vector<8x256xf32>
    %249 = vector.broadcast %206 : vector<8x1xf32> to vector<8x256xf32>
    %250 = arith.addf %248, %249 : vector<8x256xf32>
    %cst_181 = arith.constant 0.000000e+00 : f32
    %251 = vector.broadcast %cst_181 : f32 to vector<8x256xf32>
    %252 = arith.maximumf %250, %251 : vector<8x256xf32>
    %253 = tpu.concatenate %204, %252 in 0 : vector<16x256xf32>, vector<8x256xf32> -> vector<24x256xf32>
    %c0_182 = arith.constant 0 : index
    %c0_183 = arith.constant 0 : index
    %254 = vector.load %arg15[%c0_182, %c0_183] : memref<8x24xf32, #tpu.memory_space<vmem>>, vector<8x24xf32>
    %c0_184 = arith.constant 0 : index
    %c0_185 = arith.constant 0 : index
    %255 = vector.load %arg16[%c0_184, %c0_185] : memref<8x1xf32, #tpu.memory_space<vmem>>, vector<8x1xf32>
    %cst_186 = arith.constant dense<0.000000e+00> : vector<8x256xf32>
    %256 = tpu.matmul %254, %253, %cst_186 {dimension_numbers = #tpu.dot_dimension_numbers<[1], [0], [0], [1], [0, 0, 1, 1], [], []>} : vector<8x24xf32>, vector<24x256xf32>, vector<8x256xf32> -> vector<8x256xf32>
    %257 = vector.broadcast %255 : vector<8x1xf32> to vector<8x256xf32>
    %258 = arith.addf %256, %257 : vector<8x256xf32>
    %cst_187 = arith.constant 0.000000e+00 : f32
    %259 = vector.broadcast %cst_187 : f32 to vector<8x256xf32>
    %260 = arith.maximumf %258, %259 : vector<8x256xf32>
    %261 = arith.addf %155, %260 : vector<8x256xf32>
    %262 = tpu.concatenate %155, %261 in 0 : vector<8x256xf32>, vector<8x256xf32> -> vector<16x256xf32>
    %c0_188 = arith.constant 0 : index
    %c0_189 = arith.constant 0 : index
    %263 = vector.load %arg17[%c0_188, %c0_189] : memref<16x16xf32, #tpu.memory_space<vmem>>, vector<16x16xf32>
    %c0_190 = arith.constant 0 : index
    %c0_191 = arith.constant 0 : index
    %264 = vector.load %arg18[%c0_190, %c0_191] : memref<16x1xf32, #tpu.memory_space<vmem>>, vector<16x1xf32>
    %cst_192 = arith.constant dense<0.000000e+00> : vector<16x256xf32>
    %265 = tpu.matmul %263, %262, %cst_192 {dimension_numbers = #tpu.dot_dimension_numbers<[1], [0], [0], [1], [0, 0, 1, 1], [], []>} : vector<16x16xf32>, vector<16x256xf32>, vector<16x256xf32> -> vector<16x256xf32>
    %266 = vector.broadcast %264 : vector<16x1xf32> to vector<16x256xf32>
    %267 = arith.addf %265, %266 : vector<16x256xf32>
    %cst_193 = arith.constant 0.000000e+00 : f32
    %268 = vector.broadcast %cst_193 : f32 to vector<16x256xf32>
    %269 = arith.maximumf %267, %268 : vector<16x256xf32>
    %c0_194 = arith.constant 0 : index
    %c0_195 = arith.constant 0 : index
    %270 = vector.load %arg19[%c0_194, %c0_195] : memref<4x144xf32, #tpu.memory_space<vmem>>, vector<4x144xf32>
    %c0_196 = arith.constant 0 : index
    %c0_197 = arith.constant 0 : index
    %271 = vector.load %arg20[%c0_196, %c0_197] : memref<4x1xf32, #tpu.memory_space<vmem>>, vector<4x1xf32>
    %c17_i32_198 = arith.constant 17 : i32
    %272 = tpu.dynamic_rotate %269 by %c17_i32_198 dim 1 : vector<16x256xf32>, i32 -> vector<16x256xf32>
    %c0_199 = arith.constant 0 : index
    %c0_200 = arith.constant 0 : index
    %c0_201 = arith.constant 0 : index
    %273 = vector.load %arg2[%c0_199, %c0_200, %c0_201] : memref<9x1x256xf32, #tpu.memory_space<vmem>>, vector<1x1x256xf32>
    %274 = vector.shape_cast %273 : vector<1x1x256xf32> to vector<1x256xf32>
    %275 = vector.broadcast %274 : vector<1x256xf32> to vector<16x256xf32>
    %276 = arith.mulf %272, %275 : vector<16x256xf32>
    %c16_i32_202 = arith.constant 16 : i32
    %277 = tpu.dynamic_rotate %269 by %c16_i32_202 dim 1 : vector<16x256xf32>, i32 -> vector<16x256xf32>
    %c1_203 = arith.constant 1 : index
    %c0_204 = arith.constant 0 : index
    %c0_205 = arith.constant 0 : index
    %278 = vector.load %arg2[%c1_203, %c0_204, %c0_205] : memref<9x1x256xf32, #tpu.memory_space<vmem>>, vector<1x1x256xf32>
    %279 = vector.shape_cast %278 : vector<1x1x256xf32> to vector<1x256xf32>
    %280 = vector.broadcast %279 : vector<1x256xf32> to vector<16x256xf32>
    %281 = arith.mulf %277, %280 : vector<16x256xf32>
    %c15_i32_206 = arith.constant 15 : i32
    %282 = tpu.dynamic_rotate %269 by %c15_i32_206 dim 1 : vector<16x256xf32>, i32 -> vector<16x256xf32>
    %c2_207 = arith.constant 2 : index
    %c0_208 = arith.constant 0 : index
    %c0_209 = arith.constant 0 : index
    %283 = vector.load %arg2[%c2_207, %c0_208, %c0_209] : memref<9x1x256xf32, #tpu.memory_space<vmem>>, vector<1x1x256xf32>
    %284 = vector.shape_cast %283 : vector<1x1x256xf32> to vector<1x256xf32>
    %285 = vector.broadcast %284 : vector<1x256xf32> to vector<16x256xf32>
    %286 = arith.mulf %282, %285 : vector<16x256xf32>
    %c1_i32_210 = arith.constant 1 : i32
    %287 = tpu.dynamic_rotate %269 by %c1_i32_210 dim 1 : vector<16x256xf32>, i32 -> vector<16x256xf32>
    %c3_211 = arith.constant 3 : index
    %c0_212 = arith.constant 0 : index
    %c0_213 = arith.constant 0 : index
    %288 = vector.load %arg2[%c3_211, %c0_212, %c0_213] : memref<9x1x256xf32, #tpu.memory_space<vmem>>, vector<1x1x256xf32>
    %289 = vector.shape_cast %288 : vector<1x1x256xf32> to vector<1x256xf32>
    %290 = vector.broadcast %289 : vector<1x256xf32> to vector<16x256xf32>
    %291 = arith.mulf %287, %290 : vector<16x256xf32>
    %c255_i32_214 = arith.constant 255 : i32
    %292 = tpu.dynamic_rotate %269 by %c255_i32_214 dim 1 : vector<16x256xf32>, i32 -> vector<16x256xf32>
    %c5_215 = arith.constant 5 : index
    %c0_216 = arith.constant 0 : index
    %c0_217 = arith.constant 0 : index
    %293 = vector.load %arg2[%c5_215, %c0_216, %c0_217] : memref<9x1x256xf32, #tpu.memory_space<vmem>>, vector<1x1x256xf32>
    %294 = vector.shape_cast %293 : vector<1x1x256xf32> to vector<1x256xf32>
    %295 = vector.broadcast %294 : vector<1x256xf32> to vector<16x256xf32>
    %296 = arith.mulf %292, %295 : vector<16x256xf32>
    %c241_i32_218 = arith.constant 241 : i32
    %297 = tpu.dynamic_rotate %269 by %c241_i32_218 dim 1 : vector<16x256xf32>, i32 -> vector<16x256xf32>
    %c6_219 = arith.constant 6 : index
    %c0_220 = arith.constant 0 : index
    %c0_221 = arith.constant 0 : index
    %298 = vector.load %arg2[%c6_219, %c0_220, %c0_221] : memref<9x1x256xf32, #tpu.memory_space<vmem>>, vector<1x1x256xf32>
    %299 = vector.shape_cast %298 : vector<1x1x256xf32> to vector<1x256xf32>
    %300 = vector.broadcast %299 : vector<1x256xf32> to vector<16x256xf32>
    %301 = arith.mulf %297, %300 : vector<16x256xf32>
    %c240_i32_222 = arith.constant 240 : i32
    %302 = tpu.dynamic_rotate %269 by %c240_i32_222 dim 1 : vector<16x256xf32>, i32 -> vector<16x256xf32>
    %c7_223 = arith.constant 7 : index
    %c0_224 = arith.constant 0 : index
    %c0_225 = arith.constant 0 : index
    %303 = vector.load %arg2[%c7_223, %c0_224, %c0_225] : memref<9x1x256xf32, #tpu.memory_space<vmem>>, vector<1x1x256xf32>
    %304 = vector.shape_cast %303 : vector<1x1x256xf32> to vector<1x256xf32>
    %305 = vector.broadcast %304 : vector<1x256xf32> to vector<16x256xf32>
    %306 = arith.mulf %302, %305 : vector<16x256xf32>
    %c239_i32_226 = arith.constant 239 : i32
    %307 = tpu.dynamic_rotate %269 by %c239_i32_226 dim 1 : vector<16x256xf32>, i32 -> vector<16x256xf32>
    %c8_227 = arith.constant 8 : index
    %c0_228 = arith.constant 0 : index
    %c0_229 = arith.constant 0 : index
    %308 = vector.load %arg2[%c8_227, %c0_228, %c0_229] : memref<9x1x256xf32, #tpu.memory_space<vmem>>, vector<1x1x256xf32>
    %309 = vector.shape_cast %308 : vector<1x1x256xf32> to vector<1x256xf32>
    %310 = vector.broadcast %309 : vector<1x256xf32> to vector<16x256xf32>
    %311 = arith.mulf %307, %310 : vector<16x256xf32>
    %312 = tpu.concatenate %276, %281, %286, %291, %269, %296, %301, %306, %311 in 0 : vector<16x256xf32>, vector<16x256xf32>, vector<16x256xf32>, vector<16x256xf32>, vector<16x256xf32>, vector<16x256xf32>, vector<16x256xf32>, vector<16x256xf32>, vector<16x256xf32> -> vector<144x256xf32>
    %cst_230 = arith.constant dense<0.000000e+00> : vector<4x256xf32>
    %313 = tpu.matmul %270, %312, %cst_230 {dimension_numbers = #tpu.dot_dimension_numbers<[1], [0], [0], [1], [0, 0, 1, 1], [], []>} : vector<4x144xf32>, vector<144x256xf32>, vector<4x256xf32> -> vector<4x256xf32>
    %314 = vector.broadcast %271 : vector<4x1xf32> to vector<4x256xf32>
    %315 = arith.addf %313, %314 : vector<4x256xf32>
    %c0_231 = arith.constant 0 : index
    %c0_232 = arith.constant 0 : index
    %c0_233 = arith.constant 0 : index
    %316 = vector.load %arg21[%c0_231, %c0_232, %c0_233] : memref<1x4x256xf32, #tpu.memory_space<vmem>>, vector<1x4x256xf32>
    %317 = vector.shape_cast %316 : vector<1x4x256xf32> to vector<4x256xf32>
    %318 = vector.shape_cast %315 : vector<4x256xf32> to vector<1x4x256xf32>
    tpu.vector_store %arg21[%c0_231, %c0_232, %c0_233], %318 {strides = array<i32>} : memref<1x4x256xf32, #tpu.memory_space<vmem>>, vector<1x4x256xf32>,
    return
  }
  func.func @transform_0(%arg0: i32) -> (i32, i32, i32) {
    %c0_i32 = arith.constant 0 : i32
    %c0_i32_0 = arith.constant 0 : i32
    %c0_i32_1 = arith.constant 0 : i32
    return %arg0, %c0_i32, %c0_i32_0 : i32, i32, i32
  }
  func.func @transform_1(%arg0: i32) -> (i32, i32, i32) {
    %c0_i32 = arith.constant 0 : i32
    %c0_i32_0 = arith.constant 0 : i32
    %c0_i32_1 = arith.constant 0 : i32
    %c0_i32_2 = arith.constant 0 : i32
    return %c0_i32, %c0_i32_0, %c0_i32_1 : i32, i32, i32
  }
  func.func @transform_2(%arg0: i32) -> (i32, i32) {
    %c0_i32 = arith.constant 0 : i32
    %c0_i32_0 = arith.constant 0 : i32
    %c0_i32_1 = arith.constant 0 : i32
    return %c0_i32, %c0_i32_0 : i32, i32
  }
  func.func @transform_3(%arg0: i32) -> (i32, i32) {
    %c0_i32 = arith.constant 0 : i32
    %c0_i32_0 = arith.constant 0 : i32
    %c0_i32_1 = arith.constant 0 : i32
    return %c0_i32, %c0_i32_0 : i32, i32
  }
  func.func @transform_4(%arg0: i32) -> (i32, i32) {
    %c0_i32 = arith.constant 0 : i32
    %c0_i32_0 = arith.constant 0 : i32
    %c0_i32_1 = arith.constant 0 : i32
    return %c0_i32, %c0_i32_0 : i32, i32
  }
  func.func @transform_5(%arg0: i32) -> (i32, i32) {
    %c0_i32 = arith.constant 0 : i32
    %c0_i32_0 = arith.constant 0 : i32
    %c0_i32_1 = arith.constant 0 : i32
    return %c0_i32, %c0_i32_0 : i32, i32
  }
  func.func @transform_6(%arg0: i32) -> (i32, i32) {
    %c0_i32 = arith.constant 0 : i32
    %c0_i32_0 = arith.constant 0 : i32
    %c0_i32_1 = arith.constant 0 : i32
    return %c0_i32, %c0_i32_0 : i32, i32
  }
  func.func @transform_7(%arg0: i32) -> (i32, i32) {
    %c0_i32 = arith.constant 0 : i32
    %c0_i32_0 = arith.constant 0 : i32
    %c0_i32_1 = arith.constant 0 : i32
    return %c0_i32, %c0_i32_0 : i32, i32
  }
  func.func @transform_8(%arg0: i32) -> (i32, i32) {
    %c0_i32 = arith.constant 0 : i32
    %c0_i32_0 = arith.constant 0 : i32
    %c0_i32_1 = arith.constant 0 : i32
    return %c0_i32, %c0_i32_0 : i32, i32
  }
  func.func @transform_9(%arg0: i32) -> (i32, i32) {
    %c0_i32 = arith.constant 0 : i32
    %c0_i32_0 = arith.constant 0 : i32
    %c0_i32_1 = arith.constant 0 : i32
    return %c0_i32, %c0_i32_0 : i32, i32
  }
  func.func @transform_10(%arg0: i32) -> (i32, i32) {
    %c0_i32 = arith.constant 0 : i32
    %c0_i32_0 = arith.constant 0 : i32
    %c0_i32_1 = arith.constant 0 : i32
    return %c0_i32, %c0_i32_0 : i32, i32
  }
  func.func @transform_11(%arg0: i32) -> (i32, i32) {
    %c0_i32 = arith.constant 0 : i32
    %c0_i32_0 = arith.constant 0 : i32
    %c0_i32_1 = arith.constant 0 : i32
    return %c0_i32, %c0_i32_0 : i32, i32
  }
  func.func @transform_12(%arg0: i32) -> (i32, i32) {
    %c0_i32 = arith.constant 0 : i32
    %c0_i32_0 = arith.constant 0 : i32
    %c0_i32_1 = arith.constant 0 : i32
    return %c0_i32, %c0_i32_0 : i32, i32
  }
  func.func @transform_13(%arg0: i32) -> (i32, i32) {
    %c0_i32 = arith.constant 0 : i32
    %c0_i32_0 = arith.constant 0 : i32
    %c0_i32_1 = arith.constant 0 : i32
    return %c0_i32, %c0_i32_0 : i32, i32
  }
  func.func @transform_14(%arg0: i32) -> (i32, i32) {
    %c0_i32 = arith.constant 0 : i32
    %c0_i32_0 = arith.constant 0 : i32
    %c0_i32_1 = arith.constant 0 : i32
    return %c0_i32, %c0_i32_0 : i32, i32
  }
  func.func @transform_15(%arg0: i32) -> (i32, i32) {
    %c0_i32 = arith.constant 0 : i32
    %c0_i32_0 = arith.constant 0 : i32
    %c0_i32_1 = arith.constant 0 : i32
    return %c0_i32, %c0_i32_0 : i32, i32
  }
  func.func @transform_16(%arg0: i32) -> (i32, i32) {
    %c0_i32 = arith.constant 0 : i32
    %c0_i32_0 = arith.constant 0 : i32
    %c0_i32_1 = arith.constant 0 : i32
    return %c0_i32, %c0_i32_0 : i32, i32
  }
  func.func @transform_17(%arg0: i32) -> (i32, i32) {
    %c0_i32 = arith.constant 0 : i32
    %c0_i32_0 = arith.constant 0 : i32
    %c0_i32_1 = arith.constant 0 : i32
    return %c0_i32, %c0_i32_0 : i32, i32
  }
  func.func @transform_18(%arg0: i32) -> (i32, i32) {
    %c0_i32 = arith.constant 0 : i32
    %c0_i32_0 = arith.constant 0 : i32
    %c0_i32_1 = arith.constant 0 : i32
    return %c0_i32, %c0_i32_0 : i32, i32
  }
  func.func @transform_19(%arg0: i32) -> (i32, i32) {
    %c0_i32 = arith.constant 0 : i32
    %c0_i32_0 = arith.constant 0 : i32
    %c0_i32_1 = arith.constant 0 : i32
    return %c0_i32, %c0_i32_0 : i32, i32
  }
  func.func @transform_20(%arg0: i32) -> (i32, i32, i32) {
    %c0_i32 = arith.constant 0 : i32
    %c0_i32_0 = arith.constant 0 : i32
    %c0_i32_1 = arith.constant 0 : i32
    return %arg0, %c0_i32, %c0_i32_0 : i32, i32, i32
  }
}

</mosaic_0001>

<llo_original>
// kernel: forward.1
$region0: #{forward.1}
  #allocation0 [shape = 'u32[]', space=smem, size = 0x4, offset = 0x4, fixed_abs, tag = 'smem constant byte address 0x4 - core index']
  #allocation1 [shape = 'u32[144,128]{1,0:T(1,128)}', space=vmem, size = 0x12000, scoped, tag = 'internal scratch']
  %s0 = inlined_call_operand.vmem [shape: f32[2,8,256], index: 0, kind: input, shape index: {}]
  %s1 = inlined_call_operand.vmem [shape: f32[9,1,256], index: 1, kind: input, shape index: {}]
  %s2 = inlined_call_operand.vmem [shape: f32[8,72], index: 2, kind: input, shape index: {}]
  %s3 = inlined_call_operand.vmem [shape: f32[8,1], index: 3, kind: input, shape index: {}]
  %s4 = inlined_call_operand.vmem [shape: f32[8,72], index: 4, kind: input, shape index: {}]
  %s5 = inlined_call_operand.vmem [shape: f32[8,1], index: 5, kind: input, shape index: {}]
  %s6 = inlined_call_operand.vmem [shape: f32[8,144], index: 6, kind: input, shape index: {}]
  %s7 = inlined_call_operand.vmem [shape: f32[8,1], index: 7, kind: input, shape index: {}]
  %s8 = inlined_call_operand.vmem [shape: f32[8,24], index: 8, kind: input, shape index: {}]
  %s9 = inlined_call_operand.vmem [shape: f32[8,1], index: 9, kind: input, shape index: {}]
  %s10 = inlined_call_operand.vmem [shape: f32[8,72], index: 10, kind: input, shape index: {}]
  %s11 = inlined_call_operand.vmem [shape: f32[8,1], index: 11, kind: input, shape index: {}]
  %s12 = inlined_call_operand.vmem [shape: f32[8,144], index: 12, kind: input, shape index: {}]
  %s13 = inlined_call_operand.vmem [shape: f32[8,1], index: 13, kind: input, shape index: {}]
  %s14 = inlined_call_operand.vmem [shape: f32[8,24], index: 14, kind: input, shape index: {}]
  %s15 = inlined_call_operand.vmem [shape: f32[8,1], index: 15, kind: input, shape index: {}]
  %s16 = inlined_call_operand.vmem [shape: f32[16,16], index: 16, kind: input, shape index: {}]
  %s17 = inlined_call_operand.vmem [shape: f32[16,1], index: 17, kind: input, shape index: {}]
  %s18 = inlined_call_operand.vmem [shape: f32[4,144], index: 18, kind: input, shape index: {}]
  %s19 = inlined_call_operand.vmem [shape: f32[4,1], index: 19, kind: input, shape index: {}]
  %s20 = inlined_call_operand.vmem [shape: f32[2,4,256], index: 20, kind: output, shape index: {}]
  %s21 = sld [smem:[#allocation0]]
  $region113: #{forward.1} parent=0
    _
  %s23 = ssub.s32 1, %s21
  %s24 = scalar_select 0, %s23, %s21
  loop: start=0, step=1, limit=4
  $region2: #{forward.1} parent=0 // loop_pre_header
    _
  $region3: #{forward.1} parent=0 // loop_header
    %s26 = sphi 0, %s30
    %p27 = scmp.ge.s32.totalorder %s26, 4
    %s36 = sphi 0, %s38
    %s39 = sphi 0, %s36
    %s40 = sphi 0, %s39
    %s56 = sphi 0, %s40
    %s60 = sphi 0, %s60
    %s62 = sphi 0, %s60
    %s63 = sphi 0, %s62
    %s77 = sphi 0, %s63
    %s81 = sphi 0, %s81
    %s83 = sphi 0, %s81
    %s84 = sphi 0, %s83
    %s98 = sphi 0, %s84
    %s102 = sphi 0, %s102
    %s104 = sphi 0, %s102
    %s105 = sphi 0, %s104
    %s119 = sphi 0, %s105
    %s123 = sphi 0, %s123
    %s125 = sphi 0, %s123
    %s126 = sphi 0, %s125
    %s140 = sphi 0, %s126
    %s144 = sphi 0, %s144
    %s146 = sphi 0, %s144
    %s147 = sphi 0, %s146
    %s161 = sphi 0, %s147
    %s165 = sphi 0, %s165
    %s167 = sphi 0, %s165
    %s168 = sphi 0, %s167
    %s182 = sphi 0, %s168
    %s186 = sphi 0, %s186
    %s188 = sphi 0, %s186
    %s189 = sphi 0, %s188
    %s203 = sphi 0, %s189
    %s207 = sphi 0, %s207
    %s209 = sphi 0, %s207
    %s210 = sphi 0, %s209
    %s224 = sphi 0, %s210
    %s228 = sphi 0, %s228
    %s230 = sphi 0, %s228
    %s231 = sphi 0, %s230
    %s245 = sphi 0, %s231
    %s249 = sphi 0, %s249
    %s251 = sphi 0, %s249
    %s252 = sphi 0, %s251
    %s266 = sphi 0, %s252
    %s270 = sphi 0, %s270
    %s272 = sphi 0, %s270
    %s273 = sphi 0, %s272
    %s287 = sphi 0, %s273
    %s291 = sphi 0, %s291
    %s293 = sphi 0, %s291
    %s294 = sphi 0, %s293
    %s308 = sphi 0, %s294
    %s312 = sphi 0, %s312
    %s314 = sphi 0, %s312
    %s315 = sphi 0, %s314
    %s329 = sphi 0, %s315
    %s333 = sphi 0, %s333
    %s335 = sphi 0, %s333
    %s336 = sphi 0, %s335
    %s350 = sphi 0, %s336
    %s354 = sphi 0, %s354
    %s356 = sphi 0, %s354
    %s357 = sphi 0, %s356
    %s371 = sphi 0, %s357
    %s375 = sphi 0, %s375
    %s377 = sphi 0, %s375
    %s378 = sphi 0, %s377
    %s392 = sphi 0, %s378
    %s396 = sphi 0, %s396
    %s398 = sphi 0, %s396
    %s399 = sphi 0, %s398
    %s413 = sphi 0, %s399
    %s417 = sphi 0, %s417
    %s419 = sphi 0, %s417
    %s420 = sphi 0, %s419
    %s434 = sphi 0, %s420
    %s438 = sphi 0, %s438
    %s440 = sphi 0, %s438
    %s441 = sphi 0, %s440
    %s455 = sphi 0, %s441
    %s461 = sphi 0, %s463
    %s464 = sphi 0, %s461
    %s465 = sphi 0, %s464
    %s481 = sphi 0, %s465
  $region4: #{forward.1} parent=0 // loop_header_branch
    %29 = sbr.rel (%p27) target = $region8
  $region5: #{forward.1} parent=0 // loop_body
    %s31 = ssub.s32 %s26, 1
    %s32 = ssub.s32 %s26, 2
    %s33 = sadd.s32 %s26, 1
    %s34 = ssub.s32 %s26, %s33
    %p35 = scmp.eq.s32.totalorder %s34, 0
    %s37 = sadd.s32 %s36, 1
    %s38 = scalar_select %p35, %s36, %s37
    %p41 = pneg %p35
    %p42 = scmp.eq.s32.totalorder %s26, 1
    %p43 = por %p41, %p42
    %p44 = scmp.ne.s32.totalorder %s36, %s39
    %p45 = scmp.eq.s32.totalorder %s26, 0
    %p46 = por %p44, %p45
    %p47 = scmp.ne.s32.totalorder %s36, %s39
    %p48 = scmp.eq.s32.totalorder %s31, 1
    %p49 = por %p47, %p48
    %p50 = scmp.ne.s32.totalorder %s39, %s40
    %p51 = scmp.eq.s32.totalorder %s31, 0
    %p52 = por %p50, %p51
    %p53 = scmp.ne.s32.totalorder %s39, %s40
    %p54 = scmp.eq.s32.totalorder %s32, 1
    %p55 = por %p53, %p54
    %p57 = scmp.ne.s32.totalorder %s40, %s56
    %p58 = scmp.eq.s32.totalorder %s32, 0
    %p59 = por %p57, %p58
    %s61 = sadd.s32 %s60, 1
    %p64 = scmp.eq.s32.totalorder %s26, 1
    %p65 = scmp.ne.s32.totalorder %s60, %s62
    %p66 = scmp.eq.s32.totalorder %s26, 0
    %p67 = por %p65, %p66
    %p68 = scmp.ne.s32.totalorder %s60, %s62
    %p69 = scmp.eq.s32.totalorder %s31, 1
    %p70 = por %p68, %p69
    %p71 = scmp.ne.s32.totalorder %s62, %s63
    %p72 = scmp.eq.s32.totalorder %s31, 0
    %p73 = por %p71, %p72
    %p74 = scmp.ne.s32.totalorder %s62, %s63
    %p75 = scmp.eq.s32.totalorder %s32, 1
    %p76 = por %p74, %p75
    %p78 = scmp.ne.s32.totalorder %s63, %s77
    %p79 = scmp.eq.s32.totalorder %s32, 0
    %p80 = por %p78, %p79
    %s82 = sadd.s32 %s81, 1
    %p85 = scmp.eq.s32.totalorder %s26, 1
    %p86 = scmp.ne.s32.totalorder %s81, %s83
    %p87 = scmp.eq.s32.totalorder %s26, 0
    %p88 = por %p86, %p87
    %p89 = scmp.ne.s32.totalorder %s81, %s83
    %p90 = scmp.eq.s32.totalorder %s31, 1
    %p91 = por %p89, %p90
    %p92 = scmp.ne.s32.totalorder %s83, %s84
    %p93 = scmp.eq.s32.totalorder %s31, 0
    %p94 = por %p92, %p93
    %p95 = scmp.ne.s32.totalorder %s83, %s84
    %p96 = scmp.eq.s32.totalorder %s32, 1
    %p97 = por %p95, %p96
    %p99 = scmp.ne.s32.totalorder %s84, %s98
    %p100 = scmp.eq.s32.totalorder %s32, 0
    %p101 = por %p99, %p100
    %s103 = sadd.s32 %s102, 1
    %p106 = scmp.eq.s32.totalorder %s26, 1
    %p107 = scmp.ne.s32.totalorder %s102, %s104
    %p108 = scmp.eq.s32.totalorder %s26, 0
    %p109 = por %p107, %p108
    %p110 = scmp.ne.s32.totalorder %s102, %s104
    %p111 = scmp.eq.s32.totalorder %s31, 1
    %p112 = por %p110, %p111
    %p113 = scmp.ne.s32.totalorder %s104, %s105
    %p114 = scmp.eq.s32.totalorder %s31, 0
    %p115 = por %p113, %p114
    %p116 = scmp.ne.s32.totalorder %s104, %s105
    %p117 = scmp.eq.s32.totalorder %s32, 1
    %p118 = por %p116, %p117
    %p120 = scmp.ne.s32.totalorder %s105, %s119
    %p121 = scmp.eq.s32.totalorder %s32, 0
    %p122 = por %p120, %p121
    %s124 = sadd.s32 %s123, 1
    %p127 = scmp.eq.s32.totalorder %s26, 1
    %p128 = scmp.ne.s32.totalorder %s123, %s125
    %p129 = scmp.eq.s32.totalorder %s26, 0
    %p130 = por %p128, %p129
    %p131 = scmp.ne.s32.totalorder %s123, %s125
    %p132 = scmp.eq.s32.totalorder %s31, 1
    %p133 = por %p131, %p132
    %p134 = scmp.ne.s32.totalorder %s125, %s126
    %p135 = scmp.eq.s32.totalorder %s31, 0
    %p136 = por %p134, %p135
    %p137 = scmp.ne.s32.totalorder %s125, %s126
    %p138 = scmp.eq.s32.totalorder %s32, 1
    %p139 = por %p137, %p138
    %p141 = scmp.ne.s32.totalorder %s126, %s140
    %p142 = scmp.eq.s32.totalorder %s32, 0
    %p143 = por %p141, %p142
    %s145 = sadd.s32 %s144, 1
    %p148 = scmp.eq.s32.totalorder %s26, 1
    %p149 = scmp.ne.s32.totalorder %s144, %s146
    %p150 = scmp.eq.s32.totalorder %s26, 0
    %p151 = por %p149, %p150
    %p152 = scmp.ne.s32.totalorder %s144, %s146
    %p153 = scmp.eq.s32.totalorder %s31, 1
    %p154 = por %p152, %p153
    %p155 = scmp.ne.s32.totalorder %s146, %s147
    %p156 = scmp.eq.s32.totalorder %s31, 0
    %p157 = por %p155, %p156
    %p158 = scmp.ne.s32.totalorder %s146, %s147
    %p159 = scmp.eq.s32.totalorder %s32, 1
    %p160 = por %p158, %p159
    %p162 = scmp.ne.s32.totalorder %s147, %s161
    %p163 = scmp.eq.s32.totalorder %s32, 0
    %p164 = por %p162, %p163
    %s166 = sadd.s32 %s165, 1
    %p169 = scmp.eq.s32.totalorder %s26, 1
    %p170 = scmp.ne.s32.totalorder %s165, %s167
    %p171 = scmp.eq.s32.totalorder %s26, 0
    %p172 = por %p170, %p171
    %p173 = scmp.ne.s32.totalorder %s165, %s167
    %p174 = scmp.eq.s32.totalorder %s31, 1
    %p175 = por %p173, %p174
    %p176 = scmp.ne.s32.totalorder %s167, %s168
    %p177 = scmp.eq.s32.totalorder %s31, 0
    %p178 = por %p176, %p177
    %p179 = scmp.ne.s32.totalorder %s167, %s168
    %p180 = scmp.eq.s32.totalorder %s32, 1
    %p181 = por %p179, %p180
    %p183 = scmp.ne.s32.totalorder %s168, %s182
    %p184 = scmp.eq.s32.totalorder %s32, 0
    %p185 = por %p183, %p184
    %s187 = sadd.s32 %s186, 1
    %p190 = scmp.eq.s32.totalorder %s26, 1
    %p191 = scmp.ne.s32.totalorder %s186, %s188
    %p192 = scmp.eq.s32.totalorder %s26, 0
    %p193 = por %p191, %p192
    %p194 = scmp.ne.s32.totalorder %s186, %s188
    %p195 = scmp.eq.s32.totalorder %s31, 1
    %p196 = por %p194, %p195
    %p197 = scmp.ne.s32.totalorder %s188, %s189
    %p198 = scmp.eq.s32.totalorder %s31, 0
    %p199 = por %p197, %p198
    %p200 = scmp.ne.s32.totalorder %s188, %s189
    %p201 = scmp.eq.s32.totalorder %s32, 1
    %p202 = por %p200, %p201
    %p204 = scmp.ne.s32.totalorder %s189, %s203
    %p205 = scmp.eq.s32.totalorder %s32, 0
    %p206 = por %p204, %p205
    %s208 = sadd.s32 %s207, 1
    %p211 = scmp.eq.s32.totalorder %s26, 1
    %p212 = scmp.ne.s32.totalorder %s207, %s209
    %p213 = scmp.eq.s32.totalorder %s26, 0
    %p214 = por %p212, %p213
    %p215 = scmp.ne.s32.totalorder %s207, %s209
    %p216 = scmp.eq.s32.totalorder %s31, 1
    %p217 = por %p215, %p216
    %p218 = scmp.ne.s32.totalorder %s209, %s210
    %p219 = scmp.eq.s32.totalorder %s31, 0
    %p220 = por %p218, %p219
    %p221 = scmp.ne.s32.totalorder %s209, %s210
    %p222 = scmp.eq.s32.totalorder %s32, 1
    %p223 = por %p221, %p222
    %p225 = scmp.ne.s32.totalorder %s210, %s224
    %p226 = scmp.eq.s32.totalorder %s32, 0
    %p227 = por %p225, %p226
    %s229 = sadd.s32 %s228, 1
    %p232 = scmp.eq.s32.totalorder %s26, 1
    %p233 = scmp.ne.s32.totalorder %s228, %s230
    %p234 = scmp.eq.s32.totalorder %s26, 0
    %p235 = por %p233, %p234
    %p236 = scmp.ne.s32.totalorder %s228, %s230
    %p237 = scmp.eq.s32.totalorder %s31, 1
    %p238 = por %p236, %p237
    %p239 = scmp.ne.s32.totalorder %s230, %s231
    %p240 = scmp.eq.s32.totalorder %s31, 0
    %p241 = por %p239, %p240
    %p242 = scmp.ne.s32.totalorder %s230, %s231
    %p243 = scmp.eq.s32.totalorder %s32, 1
    %p244 = por %p242, %p243
    %p246 = scmp.ne.s32.totalorder %s231, %s245
    %p247 = scmp.eq.s32.totalorder %s32, 0
    %p248 = por %p246, %p247
    %s250 = sadd.s32 %s249, 1
    %p253 = scmp.eq.s32.totalorder %s26, 1
    %p254 = scmp.ne.s32.totalorder %s249, %s251
    %p255 = scmp.eq.s32.totalorder %s26, 0
    %p256 = por %p254, %p255
    %p257 = scmp.ne.s32.totalorder %s249, %s251
    %p258 = scmp.eq.s32.totalorder %s31, 1
    %p259 = por %p257, %p258
    %p260 = scmp.ne.s32.totalorder %s251, %s252
    %p261 = scmp.eq.s32.totalorder %s31, 0
    %p262 = por %p260, %p261
    %p263 = scmp.ne.s32.totalorder %s251, %s252
    %p264 = scmp.eq.s32.totalorder %s32, 1
    %p265 = por %p263, %p264
    %p267 = scmp.ne.s32.totalorder %s252, %s266
    %p268 = scmp.eq.s32.totalorder %s32, 0
    %p269 = por %p267, %p268
    %s271 = sadd.s32 %s270, 1
    %p274 = scmp.eq.s32.totalorder %s26, 1
    %p275 = scmp.ne.s32.totalorder %s270, %s272
    %p276 = scmp.eq.s32.totalorder %s26, 0
    %p277 = por %p275, %p276
    %p278 = scmp.ne.s32.totalorder %s270, %s272
    %p279 = scmp.eq.s32.totalorder %s31, 1
    %p280 = por %p278, %p279
    %p281 = scmp.ne.s32.totalorder %s272, %s273
    %p282 = scmp.eq.s32.totalorder %s31, 0
    %p283 = por %p281, %p282
    %p284 = scmp.ne.s32.totalorder %s272, %s273
    %p285 = scmp.eq.s32.totalorder %s32, 1
    %p286 = por %p284, %p285
    %p288 = scmp.ne.s32.totalorder %s273, %s287
    %p289 = scmp.eq.s32.totalorder %s32, 0
    %p290 = por %p288, %p289
    %s292 = sadd.s32 %s291, 1
    %p295 = scmp.eq.s32.totalorder %s26, 1
    %p296 = scmp.ne.s32.totalorder %s291, %s293
    %p297 = scmp.eq.s32.totalorder %s26, 0
    %p298 = por %p296, %p297
    %p299 = scmp.ne.s32.totalorder %s291, %s293
    %p300 = scmp.eq.s32.totalorder %s31, 1
    %p301 = por %p299, %p300
    %p302 = scmp.ne.s32.totalorder %s293, %s294
    %p303 = scmp.eq.s32.totalorder %s31, 0
    %p304 = por %p302, %p303
    %p305 = scmp.ne.s32.totalorder %s293, %s294
    %p306 = scmp.eq.s32.totalorder %s32, 1
    %p307 = por %p305, %p306
    %p309 = scmp.ne.s32.totalorder %s294, %s308
    %p310 = scmp.eq.s32.totalorder %s32, 0
    %p311 = por %p309, %p310
    %s313 = sadd.s32 %s312, 1
    %p316 = scmp.eq.s32.totalorder %s26, 1
    %p317 = scmp.ne.s32.totalorder %s312, %s314
    %p318 = scmp.eq.s32.totalorder %s26, 0
    %p319 = por %p317, %p318
    %p320 = scmp.ne.s32.totalorder %s312, %s314
    %p321 = scmp.eq.s32.totalorder %s31, 1
    %p322 = por %p320, %p321
    %p323 = scmp.ne.s32.totalorder %s314, %s315
    %p324 = scmp.eq.s32.totalorder %s31, 0
    %p325 = por %p323, %p324
    %p326 = scmp.ne.s32.totalorder %s314, %s315
    %p327 = scmp.eq.s32.totalorder %s32, 1
    %p328 = por %p326, %p327
    %p330 = scmp.ne.s32.totalorder %s315, %s329
    %p331 = scmp.eq.s32.totalorder %s32, 0
    %p332 = por %p330, %p331
    %s334 = sadd.s32 %s333, 1
    %p337 = scmp.eq.s32.totalorder %s26, 1
    %p338 = scmp.ne.s32.totalorder %s333, %s335
    %p339 = scmp.eq.s32.totalorder %s26, 0
    %p340 = por %p338, %p339
    %p341 = scmp.ne.s32.totalorder %s333, %s335
    %p342 = scmp.eq.s32.totalorder %s31, 1
    %p343 = por %p341, %p342
    %p344 = scmp.ne.s32.totalorder %s335, %s336
    %p345 = scmp.eq.s32.totalorder %s31, 0
    %p346 = por %p344, %p345
    %p347 = scmp.ne.s32.totalorder %s335, %s336
    %p348 = scmp.eq.s32.totalorder %s32, 1
    %p349 = por %p347, %p348
    %p351 = scmp.ne.s32.totalorder %s336, %s350
    %p352 = scmp.eq.s32.totalorder %s32, 0
    %p353 = por %p351, %p352
    %s355 = sadd.s32 %s354, 1
    %p358 = scmp.eq.s32.totalorder %s26, 1
    %p359 = scmp.ne.s32.totalorder %s354, %s356
    %p360 = scmp.eq.s32.totalorder %s26, 0
    %p361 = por %p359, %p360
    %p362 = scmp.ne.s32.totalorder %s354, %s356
    %p363 = scmp.eq.s32.totalorder %s31, 1
    %p364 = por %p362, %p363
    %p365 = scmp.ne.s32.totalorder %s356, %s357
    %p366 = scmp.eq.s32.totalorder %s31, 0
    %p367 = por %p365, %p366
    %p368 = scmp.ne.s32.totalorder %s356, %s357
    %p369 = scmp.eq.s32.totalorder %s32, 1
    %p370 = por %p368, %p369
    %p372 = scmp.ne.s32.totalorder %s357, %s371
    %p373 = scmp.eq.s32.totalorder %s32, 0
    %p374 = por %p372, %p373
    %s376 = sadd.s32 %s375, 1
    %p379 = scmp.eq.s32.totalorder %s26, 1
    %p380 = scmp.ne.s32.totalorder %s375, %s377
    %p381 = scmp.eq.s32.totalorder %s26, 0
    %p382 = por %p380, %p381
    %p383 = scmp.ne.s32.totalorder %s375, %s377
    %p384 = scmp.eq.s32.totalorder %s31, 1
    %p385 = por %p383, %p384
    %p386 = scmp.ne.s32.totalorder %s377, %s378
    %p387 = scmp.eq.s32.totalorder %s31, 0
    %p388 = por %p386, %p387
    %p389 = scmp.ne.s32.totalorder %s377, %s378
    %p390 = scmp.eq.s32.totalorder %s32, 1
    %p391 = por %p389, %p390
    %p393 = scmp.ne.s32.totalorder %s378, %s392
    %p394 = scmp.eq.s32.totalorder %s32, 0
    %p395 = por %p393, %p394
    %s397 = sadd.s32 %s396, 1
    %p400 = scmp.eq.s32.totalorder %s26, 1
    %p401 = scmp.ne.s32.totalorder %s396, %s398
    %p402 = scmp.eq.s32.totalorder %s26, 0
    %p403 = por %p401, %p402
    %p404 = scmp.ne.s32.totalorder %s396, %s398
    %p405 = scmp.eq.s32.totalorder %s31, 1
    %p406 = por %p404, %p405
    %p407 = scmp.ne.s32.totalorder %s398, %s399
    %p408 = scmp.eq.s32.totalorder %s31, 0
    %p409 = por %p407, %p408
    %p410 = scmp.ne.s32.totalorder %s398, %s399
    %p411 = scmp.eq.s32.totalorder %s32, 1
    %p412 = por %p410, %p411
    %p414 = scmp.ne.s32.totalorder %s399, %s413
    %p415 = scmp.eq.s32.totalorder %s32, 0
    %p416 = por %p414, %p415
    %s418 = sadd.s32 %s417, 1
    %p421 = scmp.eq.s32.totalorder %s26, 1
    %p422 = scmp.ne.s32.totalorder %s417, %s419
    %p423 = scmp.eq.s32.totalorder %s26, 0
    %p424 = por %p422, %p423
    %p425 = scmp.ne.s32.totalorder %s417, %s419
    %p426 = scmp.eq.s32.totalorder %s31, 1
    %p427 = por %p425, %p426
    %p428 = scmp.ne.s32.totalorder %s419, %s420
    %p429 = scmp.eq.s32.totalorder %s31, 0
    %p430 = por %p428, %p429
    %p431 = scmp.ne.s32.totalorder %s419, %s420
    %p432 = scmp.eq.s32.totalorder %s32, 1
    %p433 = por %p431, %p432
    %p435 = scmp.ne.s32.totalorder %s420, %s434
    %p436 = scmp.eq.s32.totalorder %s32, 0
    %p437 = por %p435, %p436
    %s439 = sadd.s32 %s438, 1
    %p442 = scmp.eq.s32.totalorder %s26, 1
    %p443 = scmp.ne.s32.totalorder %s438, %s440
    %p444 = scmp.eq.s32.totalorder %s26, 0
    %p445 = por %p443, %p444
    %p446 = scmp.ne.s32.totalorder %s438, %s440
    %p447 = scmp.eq.s32.totalorder %s31, 1
    %p448 = por %p446, %p447
    %p449 = scmp.ne.s32.totalorder %s440, %s441
    %p450 = scmp.eq.s32.totalorder %s31, 0
    %p451 = por %p449, %p450
    %p452 = scmp.ne.s32.totalorder %s440, %s441
    %p453 = scmp.eq.s32.totalorder %s32, 1
    %p454 = por %p452, %p453
    %p456 = scmp.ne.s32.totalorder %s441, %s455
    %p457 = scmp.eq.s32.totalorder %s32, 0
    %p458 = por %p456, %p457
    %s459 = ssub.s32 %s26, %s33
    %p460 = scmp.eq.s32.totalorder %s459, 0
    %s462 = sadd.s32 %s461, 1
    %s463 = scalar_select %p460, %s461, %s462
    %p466 = pneg %p460
    %p467 = scmp.eq.s32.totalorder %s26, 1
    %p468 = por %p466, %p467
    %p469 = scmp.ne.s32.totalorder %s461, %s464
    %p470 = scmp.eq.s32.totalorder %s26, 0
    %p471 = por %p469, %p470
    %p472 = scmp.ne.s32.totalorder %s461, %s464
    %p473 = scmp.eq.s32.totalorder %s31, 1
    %p474 = por %p472, %p473
    %p475 = scmp.ne.s32.totalorder %s464, %s465
    %p476 = scmp.eq.s32.totalorder %s31, 0
    %p477 = por %p475, %p476
    %p478 = scmp.ne.s32.totalorder %s464, %s465
    %p479 = scmp.eq.s32.totalorder %s32, 1
    %p480 = por %p478, %p479
    %p482 = scmp.ne.s32.totalorder %s465, %s481
    %p483 = scmp.eq.s32.totalorder %s32, 0
    %p484 = por %p482, %p483
    %p485 = scmp.le.s32.totalorder 1, %s26
    %p486 = scmp.lt.s32.totalorder %s26, 3
    %p487 = pnand %p485, %p486
    %p488 = pneg %p487
    // Predicated region
    $region9: #{forward.1} parent=5 // pred_check
      _
    $region10: #{forward.1} parent=5 // pred_check_branch
      %490 = sbr.rel (%p487) target = $region12
    $region11: #{forward.1} parent=5 // pred_region
      %s491 = ssub.s32 %s26, 1
      // Predicated region
      $region13: #{forward.1} parent=11 // pred_check
        %p492 = pneg %p73
      $region14: #{forward.1} parent=11 // pred_check_branch
        %494 = sbr.rel (%p492) target = $region16
      $region15: #{forward.1} parent=11 // pred_region
        _
      $region16: #{forward.1} parent=11 // pred_fallthru
        _
      // Predicated region
      $region17: #{forward.1} parent=11 // pred_check
        %p495 = pneg %p94
      $region18: #{forward.1} parent=11 // pred_check_branch
        %497 = sbr.rel (%p495) target = $region20
      $region19: #{forward.1} parent=11 // pred_region
        _
      $region20: #{forward.1} parent=11 // pred_fallthru
        _
      // Predicated region
      $region21: #{forward.1} parent=11 // pred_check
        %p498 = pneg %p115
      $region22: #{forward.1} parent=11 // pred_check_branch
        %500 = sbr.rel (%p498) target = $region24
      $region23: #{forward.1} parent=11 // pred_region
        _
      $region24: #{forward.1} parent=11 // pred_fallthru
        _
      // Predicated region
      $region25: #{forward.1} parent=11 // pred_check
        %p501 = pneg %p136
      $region26: #{forward.1} parent=11 // pred_check_branch
        %503 = sbr.rel (%p501) target = $region28
      $region27: #{forward.1} parent=11 // pred_region
        _
      $region28: #{forward.1} parent=11 // pred_fallthru
        _
      // Predicated region
      $region29: #{forward.1} parent=11 // pred_check
        %p504 = pneg %p157
      $region30: #{forward.1} parent=11 // pred_check_branch
        %506 = sbr.rel (%p504) target = $region32
      $region31: #{forward.1} parent=11 // pred_region
        _
      $region32: #{forward.1} parent=11 // pred_fallthru
        _
      // Predicated region
      $region33: #{forward.1} parent=11 // pred_check
        %p507 = pneg %p178
      $region34: #{forward.1} parent=11 // pred_check_branch
        %509 = sbr.rel (%p507) target = $region36
      $region35: #{forward.1} parent=11 // pred_region
        _
      $region36: #{forward.1} parent=11 // pred_fallthru
        _
      // Predicated region
      $region37: #{forward.1} parent=11 // pred_check
        %p510 = pneg %p199
      $region38: #{forward.1} parent=11 // pred_check_branch
        %512 = sbr.rel (%p510) target = $region40
      $region39: #{forward.1} parent=11 // pred_region
        _
      $region40: #{forward.1} parent=11 // pred_fallthru
        _
      // Predicated region
      $region41: #{forward.1} parent=11 // pred_check
        %p513 = pneg %p220
      $region42: #{forward.1} parent=11 // pred_check_branch
        %515 = sbr.rel (%p513) target = $region44
      $region43: #{forward.1} parent=11 // pred_region
        _
      $region44: #{forward.1} parent=11 // pred_fallthru
        _
      // Predicated region
      $region45: #{forward.1} parent=11 // pred_check
        %p516 = pneg %p241
      $region46: #{forward.1} parent=11 // pred_check_branch
        %518 = sbr.rel (%p516) target = $region48
      $region47: #{forward.1} parent=11 // pred_region
        _
      $region48: #{forward.1} parent=11 // pred_fallthru
        _
      // Predicated region
      $region49: #{forward.1} parent=11 // pred_check
        %p519 = pneg %p262
      $region50: #{forward.1} parent=11 // pred_check_branch
        %521 = sbr.rel (%p519) target = $region52
      $region51: #{forward.1} parent=11 // pred_region
        _
      $region52: #{forward.1} parent=11 // pred_fallthru
        _
      // Predicated region
      $region53: #{forward.1} parent=11 // pred_check
        %p522 = pneg %p283
      $region54: #{forward.1} parent=11 // pred_check_branch
        %524 = sbr.rel (%p522) target = $region56
      $region55: #{forward.1} parent=11 // pred_region
        _
      $region56: #{forward.1} parent=11 // pred_fallthru
        _
      // Predicated region
      $region57: #{forward.1} parent=11 // pred_check
        %p525 = pneg %p304
      $region58: #{forward.1} parent=11 // pred_check_branch
        %527 = sbr.rel (%p525) target = $region60
      $region59: #{forward.1} parent=11 // pred_region
        _
      $region60: #{forward.1} parent=11 // pred_fallthru
        _
      // Predicated region
      $region61: #{forward.1} parent=11 // pred_check
        %p528 = pneg %p325
      $region62: #{forward.1} parent=11 // pred_check_branch
        %530 = sbr.rel (%p528) target = $region64
      $region63: #{forward.1} parent=11 // pred_region
        _
      $region64: #{forward.1} parent=11 // pred_fallthru
        _
      // Predicated region
      $region65: #{forward.1} parent=11 // pred_check
        %p531 = pneg %p346
      $region66: #{forward.1} parent=11 // pred_check_branch
        %533 = sbr.rel (%p531) target = $region68
      $region67: #{forward.1} parent=11 // pred_region
        _
      $region68: #{forward.1} parent=11 // pred_fallthru
        _
      // Predicated region
      $region69: #{forward.1} parent=11 // pred_check
        %p534 = pneg %p367
      $region70: #{forward.1} parent=11 // pred_check_branch
        %536 = sbr.rel (%p534) target = $region72
      $region71: #{forward.1} parent=11 // pred_region
        _
      $region72: #{forward.1} parent=11 // pred_fallthru
        _
      // Predicated region
      $region73: #{forward.1} parent=11 // pred_check
        %p537 = pneg %p388
      $region74: #{forward.1} parent=11 // pred_check_branch
        %539 = sbr.rel (%p537) target = $region76
      $region75: #{forward.1} parent=11 // pred_region
        _
      $region76: #{forward.1} parent=11 // pred_fallthru
        _
      // Predicated region
      $region77: #{forward.1} parent=11 // pred_check
        %p540 = pneg %p409
      $region78: #{forward.1} parent=11 // pred_check_branch
        %542 = sbr.rel (%p540) target = $region80
      $region79: #{forward.1} parent=11 // pred_region
        _
      $region80: #{forward.1} parent=11 // pred_fallthru
        _
      // Predicated region
      $region81: #{forward.1} parent=11 // pred_check
        %p543 = pneg %p430
      $region82: #{forward.1} parent=11 // pred_check_branch
        %545 = sbr.rel (%p543) target = $region84
      $region83: #{forward.1} parent=11 // pred_region
        _
      $region84: #{forward.1} parent=11 // pred_fallthru
        _
      // Predicated region
      $region85: #{forward.1} parent=11 // pred_check
        %p546 = pneg %p451
      $region86: #{forward.1} parent=11 // pred_check_branch
        %548 = sbr.rel (%p546) target = $region88
      $region87: #{forward.1} parent=11 // pred_region
        _
      $region88: #{forward.1} parent=11 // pred_fallthru
        _
    $region12: #{forward.1} parent=5 // pred_fallthru
      _
    %p549 = scmp.lt.s32.totalorder %s26, 2
    // Predicated region
    $region89: #{forward.1} parent=5 // pred_check
      %p550 = pneg %p549
    $region90: #{forward.1} parent=5 // pred_check_branch
      %552 = sbr.rel (%p550) target = $region92
    $region91: #{forward.1} parent=5 // pred_region
      // Predicated region
      $region93: #{forward.1} parent=91 // pred_check
        %p553 = pneg %p46
      $region94: #{forward.1} parent=91 // pred_check_branch
        %555 = sbr.rel (%p553) target = $region96
      $region95: #{forward.1} parent=91 // pred_region
        %p556 = scmp.lt.s32.totalorder %s26, 1
        %s557 = scalar_select %p556, %s26, 1
        %s558 = smul.addr %s557, 2
        %s559 = smul.addr %s558, 8
        %s560 = scalar_lea.vmem %s0, %s559
      $region96: #{forward.1} parent=91 // pred_fallthru
        _
    $region92: #{forward.1} parent=5 // pred_fallthru
      _
    %p561 = scmp.le.s32.totalorder 1, %s26
    %p562 = scmp.lt.s32.totalorder %s26, 3
    %p563 = pnand %p561, %p562
    %p564 = pneg %p563
    // Predicated region
    $region97: #{forward.1} parent=5 // pred_check
      _
    $region98: #{forward.1} parent=5 // pred_check_branch
      %566 = sbr.rel (%p563) target = $region100
    $region99: #{forward.1} parent=5 // pred_region
      %s567 = ssub.s32 %s26, 1
      %p568 = scmp.lt.s32.totalorder %s31, 1
      %s569 = scalar_select %p568, %s31, 1
      %s570 = smul.addr %s569, 2
      %s571 = smul.addr %s570, 8
      %s572 = scalar_lea.vmem %s0, %s571
      %p573 = pneg %p52
      %p574 = pneg %p49
      %p575 = pneg %p73
      %p576 = pneg %p70
      %p577 = pneg %p94
      %p578 = pneg %p91
      %p579 = pneg %p115
      %p580 = pneg %p112
      %p581 = pneg %p136
      %p582 = pneg %p133
      %p583 = pneg %p157
      %p584 = pneg %p154
      %p585 = pneg %p178
      %p586 = pneg %p175
      %p587 = pneg %p199
      %p588 = pneg %p196
      %p589 = pneg %p220
      %p590 = pneg %p217
      %p591 = pneg %p241
      %p592 = pneg %p238
      %p593 = pneg %p262
      %p594 = pneg %p259
      %p595 = pneg %p283
      %p596 = pneg %p280
      %p597 = pneg %p304
      %p598 = pneg %p301
      %p599 = pneg %p325
      %p600 = pneg %p322
      %p601 = pneg %p346
      %p602 = pneg %p343
      %p603 = pneg %p367
      %p604 = pneg %p364
      %p605 = pneg %p388
      %p606 = pneg %p385
      %p607 = pneg %p409
      %p608 = pneg %p406
      %p609 = pneg %p430
      %p610 = pneg %p427
      %p611 = pneg %p451
      %p612 = pneg %p448
      %p613 = pneg %p477
      %p614 = pneg %p474
      %p615 = scmp.lt.s32.totalorder %s31, 1
      %s616 = scalar_select %p615, %s31, 1
      %s617 = smul.addr %s616, 2
      %s618 = smul.addr %s617, 4
      %s619 = scalar_lea.vmem %s20, %s618
      %p620 = scmp.lt.s32.totalorder %s31, 1
      %s621 = scalar_select %p620, %s31, 1
      %s622 = smul.addr %s621, 2
      %s623 = smul.addr %s622, 8
      %s624 = scalar_lea.vmem %s0, %s623
      %p625 = scmp.lt.s32.totalorder %s31, 1
      %s626 = scalar_select %p625, %s31, 1
      %s627 = smul.addr %s626, 2
      %s628 = smul.addr %s627, 4
      %s629 = scalar_lea.vmem %s20, %s628
      %v630 = vld [vmem:[%s624] sm:$0xff]
      %v631 = vld [vmem:[%s624 + $0x8] sm:$0xff]
      %v632 = vld [vmem:[%s2] sm:$0xff]
      %v633 = vld [vmem:[%s3] sm:$0xff]
      %634 = vrot.lane.b32.xlu0 %v630, 17
      %v635 = vpop.permute.xlu0 %634
      %636 = vrot.lane.b32.xlu0 %v631, 17
      %v637 = vpop.permute.xlu0 %636
      %v638 = vlaneseq
      %v639 = vand.u32 %v638, 127
      %vm640 = vcmp.lt.s32.totalorder %v639, 17
      %v641 = vsel %vm640, %v635, %v637
      %v642 = vsel %vm640, %v637, %v635
      %v643 = vld [vmem:[%s1] sm:$0x3]
      %v645 = vlaneseq
      %v646 = vshrl.u32 %v645, 7
      %v647 = vsub.s32 0, %v646
      %v648 = vrot.slane %v643, %v647
      %v649 = vlaneseq
      %v650 = vshrl.u32 %v649, 7
      %v651 = vsub.s32 1, %v650
      %v652 = vrot.slane %v643, %v651
      %v655 = vmul.f32 %v642, %v648
      %v656 = vmul.f32 %v641, %v652
      %657 = vrot.lane.b32.xlu0 %v630, 16
      %v658 = vpop.permute.xlu0 %657
      %659 = vrot.lane.b32.xlu0 %v631, 16
      %v660 = vpop.permute.xlu0 %659
      %vm661 = vcmp.lt.s32.totalorder %v639, 16
      %v662 = vsel %vm661, %v658, %v660
      %v663 = vsel %vm661, %v660, %v658
      %s664 = scalar_lea.vmem %s1, 2
      %v665 = vld [vmem:[%s664] sm:$0x3]
      %v667 = vlaneseq
      %v668 = vshrl.u32 %v667, 7
      %v669 = vsub.s32 0, %v668
      %v670 = vrot.slane %v665, %v669
      %v671 = vlaneseq
      %v672 = vshrl.u32 %v671, 7
      %v673 = vsub.s32 1, %v672
      %v674 = vrot.slane %v665, %v673
      %v677 = vmul.f32 %v663, %v670
      %v678 = vmul.f32 %v662, %v674
      %679 = vrot.lane.b32.xlu0 %v630, 15
      %v680 = vpop.permute.xlu0 %679
      %681 = vrot.lane.b32.xlu0 %v631, 15
      %v682 = vpop.permute.xlu0 %681
      %vm683 = vcmp.lt.s32.totalorder %v639, 15
      %v684 = vsel %vm683, %v680, %v682
      %v685 = vsel %vm683, %v682, %v680
      %s686 = scalar_lea.vmem %s1, 4
      %v687 = vld [vmem:[%s686] sm:$0x3]
      %v689 = vlaneseq
      %v690 = vshrl.u32 %v689, 7
      %v691 = vsub.s32 0, %v690
      %v692 = vrot.slane %v687, %v691
      %v693 = vlaneseq
      %v694 = vshrl.u32 %v693, 7
      %v695 = vsub.s32 1, %v694
      %v696 = vrot.slane %v687, %v695
      %v699 = vmul.f32 %v685, %v692
      %v700 = vmul.f32 %v684, %v696
      %701 = vrot.lane.b32.xlu0 %v630, 1
      %v702 = vpop.permute.xlu0 %701
      %703 = vrot.lane.b32.xlu0 %v631, 1
      %v704 = vpop.permute.xlu0 %703
      %vm705 = vcmp.lt.s32.totalorder %v639, 1
      %v706 = vsel %vm705, %v702, %v704
      %v707 = vsel %vm705, %v704, %v702
      %s708 = scalar_lea.vmem %s1, 6
      %v709 = vld [vmem:[%s708] sm:$0x3]
      %v711 = vlaneseq
      %v712 = vshrl.u32 %v711, 7
      %v713 = vsub.s32 0, %v712
      %v714 = vrot.slane %v709, %v713
      %v715 = vlaneseq
      %v716 = vshrl.u32 %v715, 7
      %v717 = vsub.s32 1, %v716
      %v718 = vrot.slane %v709, %v717
      %v721 = vmul.f32 %v707, %v714
      %v722 = vmul.f32 %v706, %v718
      %723 = vrot.lane.b32.xlu0 %v630, 127
      %v724 = vpop.permute.xlu0 %723
      %725 = vrot.lane.b32.xlu0 %v631, 127
      %v726 = vpop.permute.xlu0 %725
      %vm727 = vcmp.lt.s32.totalorder %v639, 127
      %v728 = vsel %vm727, %v724, %v726
      %v729 = vsel %vm727, %v726, %v724
      %s730 = scalar_lea.vmem %s1, 10
      %v731 = vld [vmem:[%s730] sm:$0x3]
      %v733 = vlaneseq
      %v734 = vshrl.u32 %v733, 7
      %v735 = vsub.s32 0, %v734
      %v736 = vrot.slane %v731, %v735
      %v737 = vlaneseq
      %v738 = vshrl.u32 %v737, 7
      %v739 = vsub.s32 1, %v738
      %v740 = vrot.slane %v731, %v739
      %v743 = vmul.f32 %v728, %v736
      %v744 = vmul.f32 %v729, %v740
      %745 = vrot.lane.b32.xlu0 %v630, 113
      %v746 = vpop.permute.xlu0 %745
      %747 = vrot.lane.b32.xlu0 %v631, 113
      %v748 = vpop.permute.xlu0 %747
      %vm749 = vcmp.lt.s32.totalorder %v639, 113
      %v750 = vsel %vm749, %v746, %v748
      %v751 = vsel %vm749, %v748, %v746
      %s752 = scalar_lea.vmem %s1, 12
      %v753 = vld [vmem:[%s752] sm:$0x3]
      %v755 = vlaneseq
      %v756 = vshrl.u32 %v755, 7
      %v757 = vsub.s32 0, %v756
      %v758 = vrot.slane %v753, %v757
      %v759 = vlaneseq
      %v760 = vshrl.u32 %v759, 7
      %v761 = vsub.s32 1, %v760
      %v762 = vrot.slane %v753, %v761
      %v765 = vmul.f32 %v750, %v758
      %v766 = vmul.f32 %v751, %v762
      %767 = vrot.lane.b32.xlu0 %v630, 112
      %v768 = vpop.permute.xlu0 %767
      %769 = vrot.lane.b32.xlu0 %v631, 112
      %v770 = vpop.permute.xlu0 %769
      %vm771 = vcmp.lt.s32.totalorder %v639, 112
      %v772 = vsel %vm771, %v768, %v770
      %v773 = vsel %vm771, %v770, %v768
      %s774 = scalar_lea.vmem %s1, 14
      %v775 = vld [vmem:[%s774] sm:$0x3]
      %v777 = vlaneseq
      %v778 = vshrl.u32 %v777, 7
      %v779 = vsub.s32 0, %v778
      %v780 = vrot.slane %v775, %v779
      %v781 = vlaneseq
      %v782 = vshrl.u32 %v781, 7
      %v783 = vsub.s32 1, %v782
      %v784 = vrot.slane %v775, %v783
      %v787 = vmul.f32 %v772, %v780
      %v788 = vmul.f32 %v773, %v784
      %789 = vrot.lane.b32.xlu0 %v630, 111
      %v790 = vpop.permute.xlu0 %789
      %791 = vrot.lane.b32.xlu0 %v631, 111
      %v792 = vpop.permute.xlu0 %791
      %vm793 = vcmp.lt.s32.totalorder %v639, 111
      %v794 = vsel %vm793, %v790, %v792
      %v795 = vsel %vm793, %v792, %v790
      %s796 = scalar_lea.vmem %s1, 16
      %v797 = vld [vmem:[%s796] sm:$0x3]
      %v799 = vlaneseq
      %v800 = vshrl.u32 %v799, 7
      %v801 = vsub.s32 0, %v800
      %v802 = vrot.slane %v797, %v801
      %v803 = vlaneseq
      %v804 = vshrl.u32 %v803, 7
      %v805 = vsub.s32 1, %v804
      %v806 = vrot.slane %v797, %v805
      %v809 = vmul.f32 %v794, %v802
      %v810 = vmul.f32 %v795, %v806
      %812 = vset.pattern.permute.xlu0 0
      %813 = vperm.xlu0 %812, %v633
      %v814 = vpop.permute.xlu0 %813
      %vm816 = vcmask 588800
      %v818 = vsel %vm816, %v632, 0
      %820 = vmatprep.subr.mxu0 %v656
      %821 = vmatpush1.msra.mxu0 %v655
      %822 = vmatprep.subr.mxu0 %v678
      %823 = vmatpush1.msra.mxu0 %v677
      %824 = vmatprep.subr.mxu0 %v700
      %825 = vmatpush1.msra.mxu0 %v699
      %826 = vmatprep.subr.mxu0 %v722
      %827 = vmatpush1.msra.mxu0 %v721
      %828 = vmatprep.subr.mxu0 %v631
      %829 = vmatpush1.msra.mxu0 %v630
      %830 = vmatprep.subr.mxu0 %v744
      %831 = vmatpush1.msra.mxu0 %v743
      %832 = vmatprep.subr.mxu0 %v766
      %833 = vmatpush1.msra.mxu0 %v765
      %834 = vmatprep.subr.mxu0 %v788
      %835 = vmatpush1.msra.mxu0 %v787
      %836 = vmatprep.subr.mxu0 %v810
      %837 = vmatpush1.msra.mxu0 %v809
      %838 = vmatprep.subr.mxu0 0.0
      %839 = vmatpush1.msra.mxu0 0.0
      %840 = vmatprep.subr.mxu0 0.0
      %841 = vmatpush1.msra.mxu0 0.0
      %842 = vmatprep.subr.mxu0 0.0
      %843 = vmatpush1.msra.mxu0 0.0
      %844 = vmatprep.subr.mxu0 0.0
      %845 = vmatpush1.msra.mxu0 0.0
      %846 = vmatprep.subr.mxu0 0.0
      %847 = vmatpush1.msra.mxu0 0.0
      %848 = vmatprep.subr.mxu0 0.0
      %849 = vmatpush1.msra.mxu0 0.0
      %850 = vmatprep.subr.mxu0 0.0
      %851 = vmatpush1.msra.mxu0 0.0
      %852 = vmatprep.subr.mxu0 0.0
      %853 = vmatpush1.msra.mxu0 0.0
      %854 = vmatprep.subr.mxu0 0.0
      %855 = vmatpush1.msra.mxu0 0.0
      %856 = vmatprep.subr.mxu0 0.0
      %857 = vmatpush1.msra.mxu0 0.0
      %858 = vmatprep.subr.mxu0 0.0
      %859 = vmatpush1.msra.mxu0 0.0
      %860 = vmatprep.subr.mxu0 0.0
      %861 = vmatpush1.msra.mxu0 0.0
      %862 = vmatprep.subr.mxu0 0.0
      %863 = vmatpush1.msra.mxu0 0.0
      %864 = vmatprep.subr.mxu0 0.0
      %865 = vmatpush1.msra.mxu0 0.0
      %866 = vmatprep.subr.mxu0 0.0
      %867 = vmatpush1.msra.mxu0 0.0
      %868 = vmatprep.subr.mxu0 0.0
      %869 = vmatpush1.msra.mxu0 0.0
      %870 = vmatprep.subr.mxu0 0.0
      %871 = vmatpush1.msra.mxu0 0.0
      %872 = vmatprep.subr.mxu0 0.0
      %873 = vmatpush1.msra.mxu0 0.0
      %874 = vmatprep.subr.mxu0 0.0
      %875 = vmatpush1.msra.mxu0 0.0
      %876 = vmatprep.subr.mxu0 0.0
      %877 = vmatpush1.msra.mxu0 0.0
      %878 = vmatprep.subr.mxu0 0.0
      %879 = vmatpush1.msra.mxu0 0.0
      %880 = vmatprep.subr.mxu0 0.0
      %881 = vmatpush1.msra.mxu0 0.0
      %882 = vmatprep.subr.mxu0 0.0
      %883 = vmatpush1.msra.mxu0 0.0
      %884 = vmatprep.mubr.f32.mxu0 0.0
      %885 = vmatmul.mubr.f32.gmra.mrb[0].mxu0 %v818
      %v886 = vpop.f32.mrb[0].mxu0
      %v887 = vadd.f32 %v814, %v886
      %v888 = vpop.f32.mrb[0].mxu0
      %v889 = vadd.f32 %v814, %v888
      %890 = vdwg.mxu0
      %v891 = vmax.f32 %v887, 0.0
      %v892 = vmax.f32 %v889, 0.0
      %v893 = vld [vmem:[%s4] sm:$0xff]
      %v894 = vld [vmem:[%s5] sm:$0xff]
      %895 = vrot.lane.b32.xlu0 %v891, 17
      %v896 = vpop.permute.xlu0 %895
      %897 = vrot.lane.b32.xlu0 %v892, 17
      %v898 = vpop.permute.xlu0 %897
      %v899 = vsel %vm640, %v896, %v898
      %v900 = vsel %vm640, %v898, %v896
      %v901 = vmul.f32 %v900, %v648
      %v902 = vmul.f32 %v899, %v652
      %903 = vrot.lane.b32.xlu0 %v891, 16
      %v904 = vpop.permute.xlu0 %903
      %905 = vrot.lane.b32.xlu0 %v892, 16
      %v906 = vpop.permute.xlu0 %905
      %v907 = vsel %vm661, %v904, %v906
      %v908 = vsel %vm661, %v906, %v904
      %v909 = vmul.f32 %v908, %v670
      %v910 = vmul.f32 %v907, %v674
      %911 = vrot.lane.b32.xlu0 %v891, 15
      %v912 = vpop.permute.xlu0 %911
      %913 = vrot.lane.b32.xlu0 %v892, 15
      %v914 = vpop.permute.xlu0 %913
      %v915 = vsel %vm683, %v912, %v914
      %v916 = vsel %vm683, %v914, %v912
      %v917 = vmul.f32 %v916, %v692
      %v918 = vmul.f32 %v915, %v696
      %919 = vrot.lane.b32.xlu0 %v891, 1
      %v920 = vpop.permute.xlu0 %919
      %921 = vrot.lane.b32.xlu0 %v892, 1
      %v922 = vpop.permute.xlu0 %921
      %v923 = vsel %vm705, %v920, %v922
      %v924 = vsel %vm705, %v922, %v920
      %v925 = vmul.f32 %v924, %v714
      %v926 = vmul.f32 %v923, %v718
      %927 = vrot.lane.b32.xlu0 %v891, 127
      %v928 = vpop.permute.xlu0 %927
      %929 = vrot.lane.b32.xlu0 %v892, 127
      %v930 = vpop.permute.xlu0 %929
      %v931 = vsel %vm727, %v928, %v930
      %v932 = vsel %vm727, %v930, %v928
      %v933 = vmul.f32 %v931, %v736
      %v934 = vmul.f32 %v932, %v740
      %935 = vrot.lane.b32.xlu0 %v891, 113
      %v936 = vpop.permute.xlu0 %935
      %937 = vrot.lane.b32.xlu0 %v892, 113
      %v938 = vpop.permute.xlu0 %937
      %v939 = vsel %vm749, %v936, %v938
      %v940 = vsel %vm749, %v938, %v936
      %v941 = vmul.f32 %v939, %v758
      %v942 = vmul.f32 %v940, %v762
      %943 = vrot.lane.b32.xlu0 %v891, 112
      %v944 = vpop.permute.xlu0 %943
      %945 = vrot.lane.b32.xlu0 %v892, 112
      %v946 = vpop.permute.xlu0 %945
      %v947 = vsel %vm771, %v944, %v946
      %v948 = vsel %vm771, %v946, %v944
      %v949 = vmul.f32 %v947, %v780
      %v950 = vmul.f32 %v948, %v784
      %951 = vrot.lane.b32.xlu0 %v891, 111
      %v952 = vpop.permute.xlu0 %951
      %953 = vrot.lane.b32.xlu0 %v892, 111
      %v954 = vpop.permute.xlu0 %953
      %v955 = vsel %vm793, %v952, %v954
      %v956 = vsel %vm793, %v954, %v952
      %v957 = vmul.f32 %v955, %v802
      %v958 = vmul.f32 %v956, %v806
      %960 = vset.pattern.permute.xlu0 0
      %961 = vperm.xlu0 %960, %v894
      %v962 = vpop.permute.xlu0 %961
      %v965 = vsel %vm816, %v893, 0
      %967 = vmatprep.subr.mxu0 %v902
      %968 = vmatpush1.msra.mxu0 %v901
      %969 = vmatprep.subr.mxu0 %v910
      %970 = vmatpush1.msra.mxu0 %v909
      %971 = vmatprep.subr.mxu0 %v918
      %972 = vmatpush1.msra.mxu0 %v917
      %973 = vmatprep.subr.mxu0 %v926
      %974 = vmatpush1.msra.mxu0 %v925
      %975 = vmatprep.subr.mxu0 %v892
      %976 = vmatpush1.msra.mxu0 %v891
      %977 = vmatprep.subr.mxu0 %v934
      %978 = vmatpush1.msra.mxu0 %v933
      %979 = vmatprep.subr.mxu0 %v942
      %980 = vmatpush1.msra.mxu0 %v941
      %981 = vmatprep.subr.mxu0 %v950
      %982 = vmatpush1.msra.mxu0 %v949
      %983 = vmatprep.subr.mxu0 %v958
      %984 = vmatpush1.msra.mxu0 %v957
      %985 = vmatprep.subr.mxu0 0.0
      %986 = vmatpush1.msra.mxu0 0.0
      %987 = vmatprep.subr.mxu0 0.0
      %988 = vmatpush1.msra.mxu0 0.0
      %989 = vmatprep.subr.mxu0 0.0
      %990 = vmatpush1.msra.mxu0 0.0
      %991 = vmatprep.subr.mxu0 0.0
      %992 = vmatpush1.msra.mxu0 0.0
      %993 = vmatprep.subr.mxu0 0.0
      %994 = vmatpush1.msra.mxu0 0.0
      %995 = vmatprep.subr.mxu0 0.0
      %996 = vmatpush1.msra.mxu0 0.0
      %997 = vmatprep.subr.mxu0 0.0
      %998 = vmatpush1.msra.mxu0 0.0
      %999 = vmatprep.subr.mxu0 0.0
      %1000 = vmatpush1.msra.mxu0 0.0
      %1001 = vmatprep.subr.mxu0 0.0
      %1002 = vmatpush1.msra.mxu0 0.0
      %1003 = vmatprep.subr.mxu0 0.0
      %1004 = vmatpush1.msra.mxu0 0.0
      %1005 = vmatprep.subr.mxu0 0.0
      %1006 = vmatpush1.msra.mxu0 0.0
      %1007 = vmatprep.subr.mxu0 0.0
      %1008 = vmatpush1.msra.mxu0 0.0
      %1009 = vmatprep.subr.mxu0 0.0
      %1010 = vmatpush1.msra.mxu0 0.0
      %1011 = vmatprep.subr.mxu0 0.0
      %1012 = vmatpush1.msra.mxu0 0.0
      %1013 = vmatprep.subr.mxu0 0.0
      %1014 = vmatpush1.msra.mxu0 0.0
      %1015 = vmatprep.subr.mxu0 0.0
      %1016 = vmatpush1.msra.mxu0 0.0
      %1017 = vmatprep.subr.mxu0 0.0
      %1018 = vmatpush1.msra.mxu0 0.0
      %1019 = vmatprep.subr.mxu0 0.0
      %1020 = vmatpush1.msra.mxu0 0.0
      %1021 = vmatprep.subr.mxu0 0.0
      %1022 = vmatpush1.msra.mxu0 0.0
      %1023 = vmatprep.subr.mxu0 0.0
      %1024 = vmatpush1.msra.mxu0 0.0
      %1025 = vmatprep.subr.mxu0 0.0
      %1026 = vmatpush1.msra.mxu0 0.0
      %1027 = vmatprep.subr.mxu0 0.0
      %1028 = vmatpush1.msra.mxu0 0.0
      %1029 = vmatprep.subr.mxu0 0.0
      %1030 = vmatpush1.msra.mxu0 0.0
      %1031 = vmatprep.mubr.f32.mxu0 0.0
      %1032 = vmatmul.mubr.f32.gmra.mrb[0].mxu0 %v965
      %v1033 = vpop.f32.mrb[0].mxu0
      %v1034 = vadd.f32 %v962, %v1033
      %v1035 = vpop.f32.mrb[0].mxu0
      %v1036 = vadd.f32 %v962, %v1035
      %1037 = vdwg.mxu0
      %v1038 = vmax.f32 %v1034, 0.0
      %v1039 = vmax.f32 %v1036, 0.0
      %v1040 = vld [vmem:[%s6] sm:$0xff]
      %v1041 = vld [vmem:[%s6 + $0x8] sm:$0xff]
      %v1042 = vld [vmem:[%s7] sm:$0xff]
      %1043 = vrot.lane.b32.xlu0 %v1038, 17
      %v1044 = vpop.permute.xlu0 %1043
      %1045 = vrot.lane.b32.xlu0 %v1039, 17
      %v1046 = vpop.permute.xlu0 %1045
      %v1047 = vsel %vm640, %v1044, %v1046
      %v1048 = vsel %vm640, %v1046, %v1044
      %v1049 = vmul.f32 %v1048, %v648
      %v1050 = vmul.f32 %v1047, %v652
      %1051 = vrot.lane.b32.xlu0 %v1038, 16
      %v1052 = vpop.permute.xlu0 %1051
      %1053 = vrot.lane.b32.xlu0 %v1039, 16
      %v1054 = vpop.permute.xlu0 %1053
      %v1055 = vsel %vm661, %v1052, %v1054
      %v1056 = vsel %vm661, %v1054, %v1052
      %v1057 = vmul.f32 %v1056, %v670
      %v1058 = vmul.f32 %v1055, %v674
      %1059 = vrot.lane.b32.xlu0 %v1038, 15
      %v1060 = vpop.permute.xlu0 %1059
      %1061 = vrot.lane.b32.xlu0 %v1039, 15
      %v1062 = vpop.permute.xlu0 %1061
      %v1063 = vsel %vm683, %v1060, %v1062
      %v1064 = vsel %vm683, %v1062, %v1060
      %v1065 = vmul.f32 %v1064, %v692
      %v1066 = vmul.f32 %v1063, %v696
      %1067 = vrot.lane.b32.xlu0 %v1038, 1
      %v1068 = vpop.permute.xlu0 %1067
      %1069 = vrot.lane.b32.xlu0 %v1039, 1
      %v1070 = vpop.permute.xlu0 %1069
      %v1071 = vsel %vm705, %v1068, %v1070
      %v1072 = vsel %vm705, %v1070, %v1068
      %v1073 = vmul.f32 %v1072, %v714
      %v1074 = vmul.f32 %v1071, %v718
      %1075 = vrot.lane.b32.xlu0 %v1038, 127
      %v1076 = vpop.permute.xlu0 %1075
      %1077 = vrot.lane.b32.xlu0 %v1039, 127
      %v1078 = vpop.permute.xlu0 %1077
      %v1079 = vsel %vm727, %v1076, %v1078
      %v1080 = vsel %vm727, %v1078, %v1076
      %v1081 = vmul.f32 %v1079, %v736
      %v1082 = vmul.f32 %v1080, %v740
      %1083 = vrot.lane.b32.xlu0 %v1038, 113
      %v1084 = vpop.permute.xlu0 %1083
      %1085 = vrot.lane.b32.xlu0 %v1039, 113
      %v1086 = vpop.permute.xlu0 %1085
      %v1087 = vsel %vm749, %v1084, %v1086
      %v1088 = vsel %vm749, %v1086, %v1084
      %v1089 = vmul.f32 %v1087, %v758
      %v1090 = vmul.f32 %v1088, %v762
      %1091 = vrot.lane.b32.xlu0 %v1038, 112
      %v1092 = vpop.permute.xlu0 %1091
      %1093 = vrot.lane.b32.xlu0 %v1039, 112
      %v1094 = vpop.permute.xlu0 %1093
      %v1095 = vsel %vm771, %v1092, %v1094
      %v1096 = vsel %vm771, %v1094, %v1092
      %v1097 = vmul.f32 %v1095, %v780
      %v1098 = vmul.f32 %v1096, %v784
      %1099 = vrot.lane.b32.xlu0 %v1038, 111
      %v1100 = vpop.permute.xlu0 %1099
      %1101 = vrot.lane.b32.xlu0 %v1039, 111
      %v1102 = vpop.permute.xlu0 %1101
      %v1103 = vsel %vm793, %v1100, %v1102
      %v1104 = vsel %vm793, %v1102, %v1100
      %v1105 = vmul.f32 %v1103, %v802
      %v1106 = vmul.f32 %v1104, %v806
      %1108 = vset.pattern.permute.xlu0 0
      %1109 = vperm.xlu0 %1108, %v1042
      %v1110 = vpop.permute.xlu0 %1109
      %vm1112 = vcmask 130048
      %v1114 = vsel %vm1112, %v1041, 0
      %1116 = vmatprep.subr.mxu0 %v902
      %1117 = vmatpush1.msra.mxu0 %v901
      %1118 = vmatprep.subr.mxu0 %v1050
      %1119 = vmatpush1.msra.mxu0 %v1049
      %1120 = vmatprep.subr.mxu0 %v910
      %1121 = vmatpush1.msra.mxu0 %v909
      %1122 = vmatprep.subr.mxu0 %v1058
      %1123 = vmatpush1.msra.mxu0 %v1057
      %1124 = vmatprep.subr.mxu0 %v918
      %1125 = vmatpush1.msra.mxu0 %v917
      %1126 = vmatprep.subr.mxu0 %v1066
      %1127 = vmatpush1.msra.mxu0 %v1065
      %1128 = vmatprep.subr.mxu0 %v926
      %1129 = vmatpush1.msra.mxu0 %v925
      %1130 = vmatprep.subr.mxu0 %v1074
      %1131 = vmatpush1.msra.mxu0 %v1073
      %1132 = vmatprep.subr.mxu0 %v892
      %1133 = vmatpush1.msra.mxu0 %v891
      %1134 = vmatprep.subr.mxu0 %v1039
      %1135 = vmatpush1.msra.mxu0 %v1038
      %1136 = vmatprep.subr.mxu0 %v934
      %1137 = vmatpush1.msra.mxu0 %v933
      %1138 = vmatprep.subr.mxu0 %v1082
      %1139 = vmatpush1.msra.mxu0 %v1081
      %1140 = vmatprep.subr.mxu0 %v942
      %1141 = vmatpush1.msra.mxu0 %v941
      %1142 = vmatprep.subr.mxu0 %v1090
      %1143 = vmatpush1.msra.mxu0 %v1089
      %1144 = vmatprep.subr.mxu0 %v950
      %1145 = vmatpush1.msra.mxu0 %v949
      %1146 = vmatprep.subr.mxu0 %v1098
      %1147 = vmatpush1.msra.mxu0 %v1097
      %1148 = vmatprep.subr.mxu0 %v958
      %1149 = vmatpush1.msra.mxu0 %v957
      %1150 = vmatprep.subr.mxu0 %v1106
      %1151 = vmatpush1.msra.mxu0 %v1105
      %1152 = vmatprep.subr.mxu0 0.0
      %1153 = vmatpush1.msra.mxu0 0.0
      %1154 = vmatprep.subr.mxu0 0.0
      %1155 = vmatpush1.msra.mxu0 0.0
      %1156 = vmatprep.subr.mxu0 0.0
      %1157 = vmatpush1.msra.mxu0 0.0
      %1158 = vmatprep.subr.mxu0 0.0
      %1159 = vmatpush1.msra.mxu0 0.0
      %1160 = vmatprep.subr.mxu0 0.0
      %1161 = vmatpush1.msra.mxu0 0.0
      %1162 = vmatprep.subr.mxu0 0.0
      %1163 = vmatpush1.msra.mxu0 0.0
      %1164 = vmatprep.subr.mxu0 0.0
      %1165 = vmatpush1.msra.mxu0 0.0
      %1166 = vmatprep.subr.mxu0 0.0
      %1167 = vmatpush1.msra.mxu0 0.0
      %1168 = vmatprep.subr.mxu0 0.0
      %1169 = vmatpush1.msra.mxu0 0.0
      %1170 = vmatprep.subr.mxu0 0.0
      %1171 = vmatpush1.msra.mxu0 0.0
      %1172 = vmatprep.subr.mxu0 0.0
      %1173 = vmatpush1.msra.mxu0 0.0
      %1174 = vmatprep.subr.mxu0 0.0
      %1175 = vmatpush1.msra.mxu0 0.0
      %1176 = vmatprep.subr.mxu0 0.0
      %1177 = vmatpush1.msra.mxu0 0.0
      %1178 = vmatprep.subr.mxu0 0.0
      %1179 = vmatpush1.msra.mxu0 0.0
      %1180 = vmatprep.mubr.f32.mxu0 %v1114
      %1181 = vmatmul.mubr.f32.gmra.mrb[0].mxu0 %v1040
      %v1182 = vpop.f32.mrb[0].mxu0
      %v1183 = vadd.f32 %v1110, %v1182
      %v1184 = vpop.f32.mrb[0].mxu0
      %v1185 = vadd.f32 %v1110, %v1184
      %1186 = vdwg.mxu0
      %v1187 = vmax.f32 %v1183, 0.0
      %v1188 = vmax.f32 %v1185, 0.0
      %v1189 = vld [vmem:[%s8] sm:$0xff]
      %v1190 = vld [vmem:[%s9] sm:$0xff]
      %1192 = vset.pattern.permute.xlu0 0
      %1193 = vperm.xlu0 %1192, %v1190
      %v1194 = vpop.permute.xlu0 %1193
      %vm1196 = vcmask 195584
      %v1198 = vsel %vm1196, %v1189, 0
      %1200 = vmatprep.subr.mxu0 %v892
      %1201 = vmatpush1.msra.mxu0 %v891
      %1202 = vmatprep.subr.mxu0 %v1039
      %1203 = vmatpush1.msra.mxu0 %v1038
      %1204 = vmatprep.subr.mxu0 %v1188
      %1205 = vmatpush1.msra.mxu0 %v1187
      %1206 = vmatprep.subr.mxu0 0.0
      %1207 = vmatpush1.msra.mxu0 0.0
      %1208 = vmatprep.subr.mxu0 0.0
      %1209 = vmatpush1.msra.mxu0 0.0
      %1210 = vmatprep.subr.mxu0 0.0
      %1211 = vmatpush1.msra.mxu0 0.0
      %1212 = vmatprep.subr.mxu0 0.0
      %1213 = vmatpush1.msra.mxu0 0.0
      %1214 = vmatprep.subr.mxu0 0.0
      %1215 = vmatpush1.msra.mxu0 0.0
      %1216 = vmatprep.subr.mxu0 0.0
      %1217 = vmatpush1.msra.mxu0 0.0
      %1218 = vmatprep.subr.mxu0 0.0
      %1219 = vmatpush1.msra.mxu0 0.0
      %1220 = vmatprep.subr.mxu0 0.0
      %1221 = vmatpush1.msra.mxu0 0.0
      %1222 = vmatprep.subr.mxu0 0.0
      %1223 = vmatpush1.msra.mxu0 0.0
      %1224 = vmatprep.subr.mxu0 0.0
      %1225 = vmatpush1.msra.mxu0 0.0
      %1226 = vmatprep.subr.mxu0 0.0
      %1227 = vmatpush1.msra.mxu0 0.0
      %1228 = vmatprep.subr.mxu0 0.0
      %1229 = vmatpush1.msra.mxu0 0.0
      %1230 = vmatprep.subr.mxu0 0.0
      %1231 = vmatpush1.msra.mxu0 0.0
      %1232 = vmatprep.subr.mxu0 0.0
      %1233 = vmatpush1.msra.mxu0 0.0
      %1234 = vmatprep.subr.mxu0 0.0
      %1235 = vmatpush1.msra.mxu0 0.0
      %1236 = vmatprep.subr.mxu0 0.0
      %1237 = vmatpush1.msra.mxu0 0.0
      %1238 = vmatprep.subr.mxu0 0.0
      %1239 = vmatpush1.msra.mxu0 0.0
      %1240 = vmatprep.subr.mxu0 0.0
      %1241 = vmatpush1.msra.mxu0 0.0
      %1242 = vmatprep.subr.mxu0 0.0
      %1243 = vmatpush1.msra.mxu0 0.0
      %1244 = vmatprep.subr.mxu0 0.0
      %1245 = vmatpush1.msra.mxu0 0.0
      %1246 = vmatprep.subr.mxu0 0.0
      %1247 = vmatpush1.msra.mxu0 0.0
      %1248 = vmatprep.subr.mxu0 0.0
      %1249 = vmatpush1.msra.mxu0 0.0
      %1250 = vmatprep.subr.mxu0 0.0
      %1251 = vmatpush1.msra.mxu0 0.0
      %1252 = vmatprep.subr.mxu0 0.0
      %1253 = vmatpush1.msra.mxu0 0.0
      %1254 = vmatprep.subr.mxu0 0.0
      %1255 = vmatpush1.msra.mxu0 0.0
      %1256 = vmatprep.subr.mxu0 0.0
      %1257 = vmatpush1.msra.mxu0 0.0
      %1258 = vmatprep.subr.mxu0 0.0
      %1259 = vmatpush1.msra.mxu0 0.0
      %1260 = vmatprep.subr.mxu0 0.0
      %1261 = vmatpush1.msra.mxu0 0.0
      %1262 = vmatprep.subr.mxu0 0.0
      %1263 = vmatpush1.msra.mxu0 0.0
      %1264 = vmatprep.mubr.f32.mxu0 0.0
      %1265 = vmatmul.mubr.f32.gmra.mrb[0].mxu0 %v1198
      %v1266 = vpop.f32.mrb[0].mxu0
      %v1267 = vadd.f32 %v1194, %v1266
      %v1268 = vpop.f32.mrb[0].mxu0
      %v1269 = vadd.f32 %v1194, %v1268
      %1270 = vdwg.mxu0
      %v1271 = vmax.f32 %v1267, 0.0
      %v1272 = vmax.f32 %v1269, 0.0
      %v1273 = vadd.f32 %v891, %v1271
      %v1274 = vadd.f32 %v892, %v1272
      %v1275 = vld [vmem:[%s10] sm:$0xff]
      %v1276 = vld [vmem:[%s11] sm:$0xff]
      %1277 = vrot.lane.b32.xlu0 %v1273, 17
      %v1278 = vpop.permute.xlu0 %1277
      %1279 = vrot.lane.b32.xlu0 %v1274, 17
      %v1280 = vpop.permute.xlu0 %1279
      %v1281 = vsel %vm640, %v1278, %v1280
      %v1282 = vsel %vm640, %v1280, %v1278
      %v1283 = vmul.f32 %v1282, %v648
      %v1284 = vmul.f32 %v1281, %v652
      %1285 = vrot.lane.b32.xlu0 %v1273, 16
      %v1286 = vpop.permute.xlu0 %1285
      %1287 = vrot.lane.b32.xlu0 %v1274, 16
      %v1288 = vpop.permute.xlu0 %1287
      %v1289 = vsel %vm661, %v1286, %v1288
      %v1290 = vsel %vm661, %v1288, %v1286
      %v1291 = vmul.f32 %v1290, %v670
      %v1292 = vmul.f32 %v1289, %v674
      %1293 = vrot.lane.b32.xlu0 %v1273, 15
      %v1294 = vpop.permute.xlu0 %1293
      %1295 = vrot.lane.b32.xlu0 %v1274, 15
      %v1296 = vpop.permute.xlu0 %1295
      %v1297 = vsel %vm683, %v1294, %v1296
      %v1298 = vsel %vm683, %v1296, %v1294
      %v1299 = vmul.f32 %v1298, %v692
      %v1300 = vmul.f32 %v1297, %v696
      %1301 = vrot.lane.b32.xlu0 %v1273, 1
      %v1302 = vpop.permute.xlu0 %1301
      %1303 = vrot.lane.b32.xlu0 %v1274, 1
      %v1304 = vpop.permute.xlu0 %1303
      %v1305 = vsel %vm705, %v1302, %v1304
      %v1306 = vsel %vm705, %v1304, %v1302
      %v1307 = vmul.f32 %v1306, %v714
      %v1308 = vmul.f32 %v1305, %v718
      %1309 = vrot.lane.b32.xlu0 %v1273, 127
      %v1310 = vpop.permute.xlu0 %1309
      %1311 = vrot.lane.b32.xlu0 %v1274, 127
      %v1312 = vpop.permute.xlu0 %1311
      %v1313 = vsel %vm727, %v1310, %v1312
      %v1314 = vsel %vm727, %v1312, %v1310
      %v1315 = vmul.f32 %v1313, %v736
      %v1316 = vmul.f32 %v1314, %v740
      %1317 = vrot.lane.b32.xlu0 %v1273, 113
      %v1318 = vpop.permute.xlu0 %1317
      %1319 = vrot.lane.b32.xlu0 %v1274, 113
      %v1320 = vpop.permute.xlu0 %1319
      %v1321 = vsel %vm749, %v1318, %v1320
      %v1322 = vsel %vm749, %v1320, %v1318
      %v1323 = vmul.f32 %v1321, %v758
      %v1324 = vmul.f32 %v1322, %v762
      %1325 = vrot.lane.b32.xlu0 %v1273, 112
      %v1326 = vpop.permute.xlu0 %1325
      %1327 = vrot.lane.b32.xlu0 %v1274, 112
      %v1328 = vpop.permute.xlu0 %1327
      %v1329 = vsel %vm771, %v1326, %v1328
      %v1330 = vsel %vm771, %v1328, %v1326
      %v1331 = vmul.f32 %v1329, %v780
      %v1332 = vmul.f32 %v1330, %v784
      %1333 = vrot.lane.b32.xlu0 %v1273, 111
      %v1334 = vpop.permute.xlu0 %1333
      %1335 = vrot.lane.b32.xlu0 %v1274, 111
      %v1336 = vpop.permute.xlu0 %1335
      %v1337 = vsel %vm793, %v1334, %v1336
      %v1338 = vsel %vm793, %v1336, %v1334
      %v1339 = vmul.f32 %v1337, %v802
      %v1340 = vmul.f32 %v1338, %v806
      %1342 = vset.pattern.permute.xlu0 0
      %1343 = vperm.xlu0 %1342, %v1276
      %v1344 = vpop.permute.xlu0 %1343
      %v1347 = vsel %vm816, %v1275, 0
      %1349 = vmatprep.subr.mxu0 %v1284
      %1350 = vmatpush1.msra.mxu0 %v1283
      %1351 = vmatprep.subr.mxu0 %v1292
      %1352 = vmatpush1.msra.mxu0 %v1291
      %1353 = vmatprep.subr.mxu0 %v1300
      %1354 = vmatpush1.msra.mxu0 %v1299
      %1355 = vmatprep.subr.mxu0 %v1308
      %1356 = vmatpush1.msra.mxu0 %v1307
      %1357 = vmatprep.subr.mxu0 %v1274
      %1358 = vmatpush1.msra.mxu0 %v1273
      %1359 = vmatprep.subr.mxu0 %v1316
      %1360 = vmatpush1.msra.mxu0 %v1315
      %1361 = vmatprep.subr.mxu0 %v1324
      %1362 = vmatpush1.msra.mxu0 %v1323
      %1363 = vmatprep.subr.mxu0 %v1332
      %1364 = vmatpush1.msra.mxu0 %v1331
      %1365 = vmatprep.subr.mxu0 %v1340
      %1366 = vmatpush1.msra.mxu0 %v1339
      %1367 = vmatprep.subr.mxu0 0.0
      %1368 = vmatpush1.msra.mxu0 0.0
      %1369 = vmatprep.subr.mxu0 0.0
      %1370 = vmatpush1.msra.mxu0 0.0
      %1371 = vmatprep.subr.mxu0 0.0
      %1372 = vmatpush1.msra.mxu0 0.0
      %1373 = vmatprep.subr.mxu0 0.0
      %1374 = vmatpush1.msra.mxu0 0.0
      %1375 = vmatprep.subr.mxu0 0.0
      %1376 = vmatpush1.msra.mxu0 0.0
      %1377 = vmatprep.subr.mxu0 0.0
      %1378 = vmatpush1.msra.mxu0 0.0
      %1379 = vmatprep.subr.mxu0 0.0
      %1380 = vmatpush1.msra.mxu0 0.0
      %1381 = vmatprep.subr.mxu0 0.0
      %1382 = vmatpush1.msra.mxu0 0.0
      %1383 = vmatprep.subr.mxu0 0.0
      %1384 = vmatpush1.msra.mxu0 0.0
      %1385 = vmatprep.subr.mxu0 0.0
      %1386 = vmatpush1.msra.mxu0 0.0
      %1387 = vmatprep.subr.mxu0 0.0
      %1388 = vmatpush1.msra.mxu0 0.0
      %1389 = vmatprep.subr.mxu0 0.0
      %1390 = vmatpush1.msra.mxu0 0.0
      %1391 = vmatprep.subr.mxu0 0.0
      %1392 = vmatpush1.msra.mxu0 0.0
      %1393 = vmatprep.subr.mxu0 0.0
      %1394 = vmatpush1.msra.mxu0 0.0
      %1395 = vmatprep.subr.mxu0 0.0
      %1396 = vmatpush1.msra.mxu0 0.0
      %1397 = vmatprep.subr.mxu0 0.0
      %1398 = vmatpush1.msra.mxu0 0.0
      %1399 = vmatprep.subr.mxu0 0.0
      %1400 = vmatpush1.msra.mxu0 0.0
      %1401 = vmatprep.subr.mxu0 0.0
      %1402 = vmatpush1.msra.mxu0 0.0
      %1403 = vmatprep.subr.mxu0 0.0
      %1404 = vmatpush1.msra.mxu0 0.0
      %1405 = vmatprep.subr.mxu0 0.0
      %1406 = vmatpush1.msra.mxu0 0.0
      %1407 = vmatprep.subr.mxu0 0.0
      %1408 = vmatpush1.msra.mxu0 0.0
      %1409 = vmatprep.subr.mxu0 0.0
      %1410 = vmatpush1.msra.mxu0 0.0
      %1411 = vmatprep.subr.mxu0 0.0
      %1412 = vmatpush1.msra.mxu0 0.0
      %1413 = vmatprep.mubr.f32.mxu0 0.0
      %1414 = vmatmul.mubr.f32.gmra.mrb[0].mxu0 %v1347
      %v1415 = vpop.f32.mrb[0].mxu0
      %v1416 = vadd.f32 %v1344, %v1415
      %v1417 = vpop.f32.mrb[0].mxu0
      %v1418 = vadd.f32 %v1344, %v1417
      %1419 = vdwg.mxu0
      %v1420 = vmax.f32 %v1416, 0.0
      %v1421 = vmax.f32 %v1418, 0.0
      %v1422 = vld [vmem:[%s12] sm:$0xff]
      %v1423 = vld [vmem:[%s12 + $0x8] sm:$0xff]
      %v1424 = vld [vmem:[%s13] sm:$0xff]
      %1425 = vrot.lane.b32.xlu0 %v1420, 17
      %v1426 = vpop.permute.xlu0 %1425
      %1427 = vrot.lane.b32.xlu0 %v1421, 17
      %v1428 = vpop.permute.xlu0 %1427
      %v1429 = vsel %vm640, %v1426, %v1428
      %v1430 = vsel %vm640, %v1428, %v1426
      %v1431 = vmul.f32 %v1430, %v648
      %v1432 = vmul.f32 %v1429, %v652
      %1433 = vrot.lane.b32.xlu0 %v1420, 16
      %v1434 = vpop.permute.xlu0 %1433
      %1435 = vrot.lane.b32.xlu0 %v1421, 16
      %v1436 = vpop.permute.xlu0 %1435
      %v1437 = vsel %vm661, %v1434, %v1436
      %v1438 = vsel %vm661, %v1436, %v1434
      %v1439 = vmul.f32 %v1438, %v670
      %v1440 = vmul.f32 %v1437, %v674
      %1441 = vrot.lane.b32.xlu0 %v1420, 15
      %v1442 = vpop.permute.xlu0 %1441
      %1443 = vrot.lane.b32.xlu0 %v1421, 15
      %v1444 = vpop.permute.xlu0 %1443
      %v1445 = vsel %vm683, %v1442, %v1444
      %v1446 = vsel %vm683, %v1444, %v1442
      %v1447 = vmul.f32 %v1446, %v692
      %v1448 = vmul.f32 %v1445, %v696
      %1449 = vrot.lane.b32.xlu0 %v1420, 1
      %v1450 = vpop.permute.xlu0 %1449
      %1451 = vrot.lane.b32.xlu0 %v1421, 1
      %v1452 = vpop.permute.xlu0 %1451
      %v1453 = vsel %vm705, %v1450, %v1452
      %v1454 = vsel %vm705, %v1452, %v1450
      %v1455 = vmul.f32 %v1454, %v714
      %v1456 = vmul.f32 %v1453, %v718
      %1457 = vrot.lane.b32.xlu0 %v1420, 127
      %v1458 = vpop.permute.xlu0 %1457
      %1459 = vrot.lane.b32.xlu0 %v1421, 127
      %v1460 = vpop.permute.xlu0 %1459
      %v1461 = vsel %vm727, %v1458, %v1460
      %v1462 = vsel %vm727, %v1460, %v1458
      %v1463 = vmul.f32 %v1461, %v736
      %v1464 = vmul.f32 %v1462, %v740
      %1465 = vrot.lane.b32.xlu0 %v1420, 113
      %v1466 = vpop.permute.xlu0 %1465
      %1467 = vrot.lane.b32.xlu0 %v1421, 113
      %v1468 = vpop.permute.xlu0 %1467
      %v1469 = vsel %vm749, %v1466, %v1468
      %v1470 = vsel %vm749, %v1468, %v1466
      %v1471 = vmul.f32 %v1469, %v758
      %v1472 = vmul.f32 %v1470, %v762
      %1473 = vrot.lane.b32.xlu0 %v1420, 112
      %v1474 = vpop.permute.xlu0 %1473
      %1475 = vrot.lane.b32.xlu0 %v1421, 112
      %v1476 = vpop.permute.xlu0 %1475
      %v1477 = vsel %vm771, %v1474, %v1476
      %v1478 = vsel %vm771, %v1476, %v1474
      %v1479 = vmul.f32 %v1477, %v780
      %v1480 = vmul.f32 %v1478, %v784
      %1481 = vrot.lane.b32.xlu0 %v1420, 111
      %v1482 = vpop.permute.xlu0 %1481
      %1483 = vrot.lane.b32.xlu0 %v1421, 111
      %v1484 = vpop.permute.xlu0 %1483
      %v1485 = vsel %vm793, %v1482, %v1484
      %v1486 = vsel %vm793, %v1484, %v1482
      %v1487 = vmul.f32 %v1485, %v802
      %v1488 = vmul.f32 %v1486, %v806
      %1490 = vset.pattern.permute.xlu0 0
      %1491 = vperm.xlu0 %1490, %v1424
      %v1492 = vpop.permute.xlu0 %1491
      %v1495 = vsel %vm1112, %v1423, 0
      %1497 = vmatprep.subr.mxu0 %v1284
      %1498 = vmatpush1.msra.mxu0 %v1283
      %1499 = vmatprep.subr.mxu0 %v1432
      %1500 = vmatpush1.msra.mxu0 %v1431
      %1501 = vmatprep.subr.mxu0 %v1292
      %1502 = vmatpush1.msra.mxu0 %v1291
      %1503 = vmatprep.subr.mxu0 %v1440
      %1504 = vmatpush1.msra.mxu0 %v1439
      %1505 = vmatprep.subr.mxu0 %v1300
      %1506 = vmatpush1.msra.mxu0 %v1299
      %1507 = vmatprep.subr.mxu0 %v1448
      %1508 = vmatpush1.msra.mxu0 %v1447
      %1509 = vmatprep.subr.mxu0 %v1308
      %1510 = vmatpush1.msra.mxu0 %v1307
      %1511 = vmatprep.subr.mxu0 %v1456
      %1512 = vmatpush1.msra.mxu0 %v1455
      %1513 = vmatprep.subr.mxu0 %v1274
      %1514 = vmatpush1.msra.mxu0 %v1273
      %1515 = vmatprep.subr.mxu0 %v1421
      %1516 = vmatpush1.msra.mxu0 %v1420
      %1517 = vmatprep.subr.mxu0 %v1316
      %1518 = vmatpush1.msra.mxu0 %v1315
      %1519 = vmatprep.subr.mxu0 %v1464
      %1520 = vmatpush1.msra.mxu0 %v1463
      %1521 = vmatprep.subr.mxu0 %v1324
      %1522 = vmatpush1.msra.mxu0 %v1323
      %1523 = vmatprep.subr.mxu0 %v1472
      %1524 = vmatpush1.msra.mxu0 %v1471
      %1525 = vmatprep.subr.mxu0 %v1332
      %1526 = vmatpush1.msra.mxu0 %v1331
      %1527 = vmatprep.subr.mxu0 %v1480
      %1528 = vmatpush1.msra.mxu0 %v1479
      %1529 = vmatprep.subr.mxu0 %v1340
      %1530 = vmatpush1.msra.mxu0 %v1339
      %1531 = vmatprep.subr.mxu0 %v1488
      %1532 = vmatpush1.msra.mxu0 %v1487
      %1533 = vmatprep.subr.mxu0 0.0
      %1534 = vmatpush1.msra.mxu0 0.0
      %1535 = vmatprep.subr.mxu0 0.0
      %1536 = vmatpush1.msra.mxu0 0.0
      %1537 = vmatprep.subr.mxu0 0.0
      %1538 = vmatpush1.msra.mxu0 0.0
      %1539 = vmatprep.subr.mxu0 0.0
      %1540 = vmatpush1.msra.mxu0 0.0
      %1541 = vmatprep.subr.mxu0 0.0
      %1542 = vmatpush1.msra.mxu0 0.0
      %1543 = vmatprep.subr.mxu0 0.0
      %1544 = vmatpush1.msra.mxu0 0.0
      %1545 = vmatprep.subr.mxu0 0.0
      %1546 = vmatpush1.msra.mxu0 0.0
      %1547 = vmatprep.subr.mxu0 0.0
      %1548 = vmatpush1.msra.mxu0 0.0
      %1549 = vmatprep.subr.mxu0 0.0
      %1550 = vmatpush1.msra.mxu0 0.0
      %1551 = vmatprep.subr.mxu0 0.0
      %1552 = vmatpush1.msra.mxu0 0.0
      %1553 = vmatprep.subr.mxu0 0.0
      %1554 = vmatpush1.msra.mxu0 0.0
      %1555 = vmatprep.subr.mxu0 0.0
      %1556 = vmatpush1.msra.mxu0 0.0
      %1557 = vmatprep.subr.mxu0 0.0
      %1558 = vmatpush1.msra.mxu0 0.0
      %1559 = vmatprep.subr.mxu0 0.0
      %1560 = vmatpush1.msra.mxu0 0.0
      %1561 = vmatprep.mubr.f32.mxu0 %v1495
      %1562 = vmatmul.mubr.f32.gmra.mrb[0].mxu0 %v1422
      %v1563 = vpop.f32.mrb[0].mxu0
      %v1564 = vadd.f32 %v1492, %v1563
      %v1565 = vpop.f32.mrb[0].mxu0
      %v1566 = vadd.f32 %v1492, %v1565
      %1567 = vdwg.mxu0
      %v1568 = vmax.f32 %v1564, 0.0
      %v1569 = vmax.f32 %v1566, 0.0
      %v1570 = vld [vmem:[%s14] sm:$0xff]
      %v1571 = vld [vmem:[%s15] sm:$0xff]
      %1573 = vset.pattern.permute.xlu0 0
      %1574 = vperm.xlu0 %1573, %v1571
      %v1575 = vpop.permute.xlu0 %1574
      %v1578 = vsel %vm1196, %v1570, 0
      %1580 = vmatprep.subr.mxu0 %v1274
      %1581 = vmatpush1.msra.mxu0 %v1273
      %1582 = vmatprep.subr.mxu0 %v1421
      %1583 = vmatpush1.msra.mxu0 %v1420
      %1584 = vmatprep.subr.mxu0 %v1569
      %1585 = vmatpush1.msra.mxu0 %v1568
      %1586 = vmatprep.subr.mxu0 0.0
      %1587 = vmatpush1.msra.mxu0 0.0
      %1588 = vmatprep.subr.mxu0 0.0
      %1589 = vmatpush1.msra.mxu0 0.0
      %1590 = vmatprep.subr.mxu0 0.0
      %1591 = vmatpush1.msra.mxu0 0.0
      %1592 = vmatprep.subr.mxu0 0.0
      %1593 = vmatpush1.msra.mxu0 0.0
      %1594 = vmatprep.subr.mxu0 0.0
      %1595 = vmatpush1.msra.mxu0 0.0
      %1596 = vmatprep.subr.mxu0 0.0
      %1597 = vmatpush1.msra.mxu0 0.0
      %1598 = vmatprep.subr.mxu0 0.0
      %1599 = vmatpush1.msra.mxu0 0.0
      %1600 = vmatprep.subr.mxu0 0.0
      %1601 = vmatpush1.msra.mxu0 0.0
      %1602 = vmatprep.subr.mxu0 0.0
      %1603 = vmatpush1.msra.mxu0 0.0
      %1604 = vmatprep.subr.mxu0 0.0
      %1605 = vmatpush1.msra.mxu0 0.0
      %1606 = vmatprep.subr.mxu0 0.0
      %1607 = vmatpush1.msra.mxu0 0.0
      %1608 = vmatprep.subr.mxu0 0.0
      %1609 = vmatpush1.msra.mxu0 0.0
      %1610 = vmatprep.subr.mxu0 0.0
      %1611 = vmatpush1.msra.mxu0 0.0
      %1612 = vmatprep.subr.mxu0 0.0
      %1613 = vmatpush1.msra.mxu0 0.0
      %1614 = vmatprep.subr.mxu0 0.0
      %1615 = vmatpush1.msra.mxu0 0.0
      %1616 = vmatprep.subr.mxu0 0.0
      %1617 = vmatpush1.msra.mxu0 0.0
      %1618 = vmatprep.subr.mxu0 0.0
      %1619 = vmatpush1.msra.mxu0 0.0
      %1620 = vmatprep.subr.mxu0 0.0
      %1621 = vmatpush1.msra.mxu0 0.0
      %1622 = vmatprep.subr.mxu0 0.0
      %1623 = vmatpush1.msra.mxu0 0.0
      %1624 = vmatprep.subr.mxu0 0.0
      %1625 = vmatpush1.msra.mxu0 0.0
      %1626 = vmatprep.subr.mxu0 0.0
      %1627 = vmatpush1.msra.mxu0 0.0
      %1628 = vmatprep.subr.mxu0 0.0
      %1629 = vmatpush1.msra.mxu0 0.0
      %1630 = vmatprep.subr.mxu0 0.0
      %1631 = vmatpush1.msra.mxu0 0.0
      %1632 = vmatprep.subr.mxu0 0.0
      %1633 = vmatpush1.msra.mxu0 0.0
      %1634 = vmatprep.subr.mxu0 0.0
      %1635 = vmatpush1.msra.mxu0 0.0
      %1636 = vmatprep.subr.mxu0 0.0
      %1637 = vmatpush1.msra.mxu0 0.0
      %1638 = vmatprep.subr.mxu0 0.0
      %1639 = vmatpush1.msra.mxu0 0.0
      %1640 = vmatprep.subr.mxu0 0.0
      %1641 = vmatpush1.msra.mxu0 0.0
      %1642 = vmatprep.subr.mxu0 0.0
      %1643 = vmatpush1.msra.mxu0 0.0
      %1644 = vmatprep.mubr.f32.mxu0 0.0
      %1645 = vmatmul.mubr.f32.gmra.mrb[0].mxu0 %v1578
      %v1646 = vpop.f32.mrb[0].mxu0
      %v1647 = vadd.f32 %v1575, %v1646
      %v1648 = vpop.f32.mrb[0].mxu0
      %v1649 = vadd.f32 %v1575, %v1648
      %1650 = vdwg.mxu0
      %v1651 = vmax.f32 %v1647, 0.0
      %v1652 = vmax.f32 %v1649, 0.0
      %v1653 = vadd.f32 %v1273, %v1651
      %v1654 = vadd.f32 %v1274, %v1652
      %v1655 = vld [vmem:[%s16] sm:$0xff]
      %v1656 = vld [vmem:[%s16 + $0x8] sm:$0xff]
      %v1657 = vld [vmem:[%s17] sm:$0xff]
      %v1658 = vld [vmem:[%s17 + $0x8] sm:$0xff]
      %1660 = vset.pattern.permute.xlu0 0
      %1661 = vperm.xlu0 %1660, %v1657
      %v1662 = vpop.permute.xlu0 %1661
      %1665 = vset.pattern.permute.xlu0 0
      %1666 = vperm.xlu0 %1665, %v1658
      %v1667 = vpop.permute.xlu0 %1666
      %v1670 = vsel %vm1112, %v1655, 0
      %v1673 = vsel %vm1112, %v1656, 0
      %1675 = vmatprep.subr.mxu0 %v1274
      %1676 = vmatpush1.msra.mxu0 %v1273
      %1677 = vmatprep.subr.mxu0 %v1654
      %1678 = vmatpush1.msra.mxu0 %v1653
      %1679 = vmatprep.subr.mxu0 0.0
      %1680 = vmatpush1.msra.mxu0 0.0
      %1681 = vmatprep.subr.mxu0 0.0
      %1682 = vmatpush1.msra.mxu0 0.0
      %1683 = vmatprep.subr.mxu0 0.0
      %1684 = vmatpush1.msra.mxu0 0.0
      %1685 = vmatprep.subr.mxu0 0.0
      %1686 = vmatpush1.msra.mxu0 0.0
      %1687 = vmatprep.subr.mxu0 0.0
      %1688 = vmatpush1.msra.mxu0 0.0
      %1689 = vmatprep.subr.mxu0 0.0
      %1690 = vmatpush1.msra.mxu0 0.0
      %1691 = vmatprep.subr.mxu0 0.0
      %1692 = vmatpush1.msra.mxu0 0.0
      %1693 = vmatprep.subr.mxu0 0.0
      %1694 = vmatpush1.msra.mxu0 0.0
      %1695 = vmatprep.subr.mxu0 0.0
      %1696 = vmatpush1.msra.mxu0 0.0
      %1697 = vmatprep.subr.mxu0 0.0
      %1698 = vmatpush1.msra.mxu0 0.0
      %1699 = vmatprep.subr.mxu0 0.0
      %1700 = vmatpush1.msra.mxu0 0.0
      %1701 = vmatprep.subr.mxu0 0.0
      %1702 = vmatpush1.msra.mxu0 0.0
      %1703 = vmatprep.subr.mxu0 0.0
      %1704 = vmatpush1.msra.mxu0 0.0
      %1705 = vmatprep.subr.mxu0 0.0
      %1706 = vmatpush1.msra.mxu0 0.0
      %1707 = vmatprep.subr.mxu0 0.0
      %1708 = vmatpush1.msra.mxu0 0.0
      %1709 = vmatprep.subr.mxu0 0.0
      %1710 = vmatpush1.msra.mxu0 0.0
      %1711 = vmatprep.subr.mxu0 0.0
      %1712 = vmatpush1.msra.mxu0 0.0
      %1713 = vmatprep.subr.mxu0 0.0
      %1714 = vmatpush1.msra.mxu0 0.0
      %1715 = vmatprep.subr.mxu0 0.0
      %1716 = vmatpush1.msra.mxu0 0.0
      %1717 = vmatprep.subr.mxu0 0.0
      %1718 = vmatpush1.msra.mxu0 0.0
      %1719 = vmatprep.subr.mxu0 0.0
      %1720 = vmatpush1.msra.mxu0 0.0
      %1721 = vmatprep.subr.mxu0 0.0
      %1722 = vmatpush1.msra.mxu0 0.0
      %1723 = vmatprep.subr.mxu0 0.0
      %1724 = vmatpush1.msra.mxu0 0.0
      %1725 = vmatprep.subr.mxu0 0.0
      %1726 = vmatpush1.msra.mxu0 0.0
      %1727 = vmatprep.subr.mxu0 0.0
      %1728 = vmatpush1.msra.mxu0 0.0
      %1729 = vmatprep.subr.mxu0 0.0
      %1730 = vmatpush1.msra.mxu0 0.0
      %1731 = vmatprep.subr.mxu0 0.0
      %1732 = vmatpush1.msra.mxu0 0.0
      %1733 = vmatprep.subr.mxu0 0.0
      %1734 = vmatpush1.msra.mxu0 0.0
      %1735 = vmatprep.subr.mxu0 0.0
      %1736 = vmatpush1.msra.mxu0 0.0
      %1737 = vmatprep.subr.mxu0 0.0
      %1738 = vmatpush1.msra.mxu0 0.0
      %1739 = vmatprep.mubr.f32.mxu0 0.0
      %1740 = vmatmul.mubr.f32.gmra.mrb[0].mxu0 %v1670
      %v1741 = vpop.f32.mrb[0].mxu0
      %v1742 = vadd.f32 %v1662, %v1741
      %v1743 = vpop.f32.mrb[0].mxu0
      %v1744 = vadd.f32 %v1662, %v1743
      %1745 = vmatprep.mubr.f32.mxu0 0.0
      %1746 = vmatmul.mubr.f32.gmra.mrb[0].mxu0 %v1673
      %v1747 = vpop.f32.mrb[0].mxu0
      %v1748 = vadd.f32 %v1667, %v1747
      %v1749 = vpop.f32.mrb[0].mxu0
      %v1750 = vadd.f32 %v1667, %v1749
      %1751 = vdwg.mxu0
      %v1752 = vmax.f32 %v1742, 0.0
      %v1753 = vmax.f32 %v1744, 0.0
      %v1754 = vmax.f32 %v1748, 0.0
      %v1755 = vmax.f32 %v1750, 0.0
      %v1756 = vld [vmem:[%s18] sm:$0xff]
      %v1757 = vld [vmem:[%s19] sm:$0xf]
      %1758 = vrot.lane.b32.xlu0 %v1752, 17
      %v1759 = vpop.permute.xlu0 %1758
      %1760 = vrot.lane.b32.xlu0 %v1754, 17
      %v1761 = vpop.permute.xlu0 %1760
      %1762 = vrot.lane.b32.xlu0 %v1753, 17
      %v1763 = vpop.permute.xlu0 %1762
      %1764 = vrot.lane.b32.xlu0 %v1755, 17
      %v1765 = vpop.permute.xlu0 %1764
      %v1766 = vsel %vm640, %v1759, %v1763
      %v1767 = vsel %vm640, %v1761, %v1765
      %v1768 = vsel %vm640, %v1763, %v1759
      %v1769 = vsel %vm640, %v1765, %v1761
      %v1770 = vmul.f32 %v1768, %v648
      %v1771 = vmul.f32 %v1766, %v652
      %v1772 = vmul.f32 %v1769, %v648
      %v1773 = vmul.f32 %v1767, %v652
      %1774 = vrot.lane.b32.xlu0 %v1752, 16
      %v1775 = vpop.permute.xlu0 %1774
      %1776 = vrot.lane.b32.xlu0 %v1754, 16
      %v1777 = vpop.permute.xlu0 %1776
      %1778 = vrot.lane.b32.xlu0 %v1753, 16
      %v1779 = vpop.permute.xlu0 %1778
      %1780 = vrot.lane.b32.xlu0 %v1755, 16
      %v1781 = vpop.permute.xlu0 %1780
      %v1782 = vsel %vm661, %v1775, %v1779
      %v1783 = vsel %vm661, %v1777, %v1781
      %v1784 = vsel %vm661, %v1779, %v1775
      %v1785 = vsel %vm661, %v1781, %v1777
      %v1786 = vmul.f32 %v1784, %v670
      %v1787 = vmul.f32 %v1782, %v674
      %v1788 = vmul.f32 %v1785, %v670
      %v1789 = vmul.f32 %v1783, %v674
      %1790 = vrot.lane.b32.xlu0 %v1752, 15
      %v1791 = vpop.permute.xlu0 %1790
      %1792 = vrot.lane.b32.xlu0 %v1754, 15
      %v1793 = vpop.permute.xlu0 %1792
      %1794 = vrot.lane.b32.xlu0 %v1753, 15
      %v1795 = vpop.permute.xlu0 %1794
      %1796 = vrot.lane.b32.xlu0 %v1755, 15
      %v1797 = vpop.permute.xlu0 %1796
      %v1798 = vsel %vm683, %v1791, %v1795
      %v1799 = vsel %vm683, %v1793, %v1797
      %v1800 = vsel %vm683, %v1795, %v1791
      %v1801 = vsel %vm683, %v1797, %v1793
      %v1802 = vmul.f32 %v1800, %v692
      %v1803 = vmul.f32 %v1798, %v696
      %v1804 = vmul.f32 %v1801, %v692
      %v1805 = vmul.f32 %v1799, %v696
      %1806 = vrot.lane.b32.xlu0 %v1752, 1
      %v1807 = vpop.permute.xlu0 %1806
      %1808 = vrot.lane.b32.xlu0 %v1754, 1
      %v1809 = vpop.permute.xlu0 %1808
      %1810 = vrot.lane.b32.xlu0 %v1753, 1
      %v1811 = vpop.permute.xlu0 %1810
      %1812 = vrot.lane.b32.xlu0 %v1755, 1
      %v1813 = vpop.permute.xlu0 %1812
      %v1814 = vsel %vm705, %v1807, %v1811
      %v1815 = vsel %vm705, %v1809, %v1813
      %v1816 = vsel %vm705, %v1811, %v1807
      %v1817 = vsel %vm705, %v1813, %v1809
      %v1818 = vmul.f32 %v1816, %v714
      %v1819 = vmul.f32 %v1814, %v718
      %v1820 = vmul.f32 %v1817, %v714
      %v1821 = vmul.f32 %v1815, %v718
      %1822 = vrot.lane.b32.xlu0 %v1752, 127
      %v1823 = vpop.permute.xlu0 %1822
      %1824 = vrot.lane.b32.xlu0 %v1754, 127
      %v1825 = vpop.permute.xlu0 %1824
      %1826 = vrot.lane.b32.xlu0 %v1753, 127
      %v1827 = vpop.permute.xlu0 %1826
      %1828 = vrot.lane.b32.xlu0 %v1755, 127
      %v1829 = vpop.permute.xlu0 %1828
      %v1830 = vsel %vm727, %v1823, %v1827
      %v1831 = vsel %vm727, %v1825, %v1829
      %v1832 = vsel %vm727, %v1827, %v1823
      %v1833 = vsel %vm727, %v1829, %v1825
      %v1834 = vmul.f32 %v1830, %v736
      %v1835 = vmul.f32 %v1832, %v740
      %v1836 = vmul.f32 %v1831, %v736
      %v1837 = vmul.f32 %v1833, %v740
      %1838 = vrot.lane.b32.xlu0 %v1752, 113
      %v1839 = vpop.permute.xlu0 %1838
      %1840 = vrot.lane.b32.xlu0 %v1754, 113
      %v1841 = vpop.permute.xlu0 %1840
      %1842 = vrot.lane.b32.xlu0 %v1753, 113
      %v1843 = vpop.permute.xlu0 %1842
      %1844 = vrot.lane.b32.xlu0 %v1755, 113
      %v1845 = vpop.permute.xlu0 %1844
      %v1846 = vsel %vm749, %v1839, %v1843
      %v1847 = vsel %vm749, %v1841, %v1845
      %v1848 = vsel %vm749, %v1843, %v1839
      %v1849 = vsel %vm749, %v1845, %v1841
      %v1850 = vmul.f32 %v1846, %v758
      %v1851 = vmul.f32 %v1848, %v762
      %v1852 = vmul.f32 %v1847, %v758
      %v1853 = vmul.f32 %v1849, %v762
      %1854 = vrot.lane.b32.xlu0 %v1752, 112
      %v1855 = vpop.permute.xlu0 %1854
      %1856 = vrot.lane.b32.xlu0 %v1754, 112
      %v1857 = vpop.permute.xlu0 %1856
      %1858 = vrot.lane.b32.xlu0 %v1753, 112
      %v1859 = vpop.permute.xlu0 %1858
      %1860 = vrot.lane.b32.xlu0 %v1755, 112
      %v1861 = vpop.permute.xlu0 %1860
      %v1862 = vsel %vm771, %v1855, %v1859
      %v1863 = vsel %vm771, %v1857, %v1861
      %v1864 = vsel %vm771, %v1859, %v1855
      %v1865 = vsel %vm771, %v1861, %v1857
      %v1866 = vmul.f32 %v1862, %v780
      %v1867 = vmul.f32 %v1864, %v784
      %v1868 = vmul.f32 %v1863, %v780
      %v1869 = vmul.f32 %v1865, %v784
      %1870 = vrot.lane.b32.xlu0 %v1752, 111
      %v1871 = vpop.permute.xlu0 %1870
      %1872 = vrot.lane.b32.xlu0 %v1754, 111
      %v1873 = vpop.permute.xlu0 %1872
      %1874 = vrot.lane.b32.xlu0 %v1753, 111
      %v1875 = vpop.permute.xlu0 %1874
      %1876 = vrot.lane.b32.xlu0 %v1755, 111
      %v1877 = vpop.permute.xlu0 %1876
      %v1878 = vsel %vm793, %v1871, %v1875
      %v1879 = vsel %vm793, %v1873, %v1877
      %v1880 = vsel %vm793, %v1875, %v1871
      %v1881 = vsel %vm793, %v1877, %v1873
      %v1882 = vmul.f32 %v1878, %v802
      %v1883 = vmul.f32 %v1880, %v806
      %v1884 = vmul.f32 %v1879, %v802
      %v1885 = vmul.f32 %v1881, %v806
      %1887 = vset.pattern.permute.xlu0 0
      %1888 = vperm.xlu0 %1887, %v1757
      %v1889 = vpop.permute.xlu0 %1888
      %v1892 = vcombine.high %v1756, %v1756
      %v1893 = vsel %vm1112, %v1892, 0
      %1895 = vmatprep.subr.mxu0 %v1771
      %1896 = vmatpush1.msra.mxu0 %v1770
      %1897 = vmatprep.subr.mxu0 %v1773
      %1898 = vmatpush1.msra.mxu0 %v1772
      %1899 = vmatprep.subr.mxu0 %v1787
      %1900 = vmatpush1.msra.mxu0 %v1786
      %1901 = vmatprep.subr.mxu0 %v1789
      %1902 = vmatpush1.msra.mxu0 %v1788
      %1903 = vmatprep.subr.mxu0 %v1803
      %1904 = vmatpush1.msra.mxu0 %v1802
      %1905 = vmatprep.subr.mxu0 %v1805
      %1906 = vmatpush1.msra.mxu0 %v1804
      %1907 = vmatprep.subr.mxu0 %v1819
      %1908 = vmatpush1.msra.mxu0 %v1818
      %1909 = vmatprep.subr.mxu0 %v1821
      %1910 = vmatpush1.msra.mxu0 %v1820
      %1911 = vmatprep.subr.mxu0 %v1753
      %1912 = vmatpush1.msra.mxu0 %v1752
      %1913 = vmatprep.subr.mxu0 %v1755
      %1914 = vmatpush1.msra.mxu0 %v1754
      %1915 = vmatprep.subr.mxu0 %v1835
      %1916 = vmatpush1.msra.mxu0 %v1834
      %1917 = vmatprep.subr.mxu0 %v1837
      %1918 = vmatpush1.msra.mxu0 %v1836
      %1919 = vmatprep.subr.mxu0 %v1851
      %1920 = vmatpush1.msra.mxu0 %v1850
      %1921 = vmatprep.subr.mxu0 %v1853
      %1922 = vmatpush1.msra.mxu0 %v1852
      %1923 = vmatprep.subr.mxu0 %v1867
      %1924 = vmatpush1.msra.mxu0 %v1866
      %1925 = vmatprep.subr.mxu0 %v1869
      %1926 = vmatpush1.msra.mxu0 %v1868
      %1927 = vmatprep.subr.mxu0 %v1883
      %1928 = vmatpush1.msra.mxu0 %v1882
      %1929 = vmatprep.subr.mxu0 %v1885
      %1930 = vmatpush1.msra.mxu0 %v1884
      %1931 = vmatprep.subr.mxu0 0.0
      %1932 = vmatpush1.msra.mxu0 0.0
      %1933 = vmatprep.subr.mxu0 0.0
      %1934 = vmatpush1.msra.mxu0 0.0
      %1935 = vmatprep.subr.mxu0 0.0
      %1936 = vmatpush1.msra.mxu0 0.0
      %1937 = vmatprep.subr.mxu0 0.0
      %1938 = vmatpush1.msra.mxu0 0.0
      %1939 = vmatprep.subr.mxu0 0.0
      %1940 = vmatpush1.msra.mxu0 0.0
      %1941 = vmatprep.subr.mxu0 0.0
      %1942 = vmatpush1.msra.mxu0 0.0
      %1943 = vmatprep.subr.mxu0 0.0
      %1944 = vmatpush1.msra.mxu0 0.0
      %1945 = vmatprep.subr.mxu0 0.0
      %1946 = vmatpush1.msra.mxu0 0.0
      %1947 = vmatprep.subr.mxu0 0.0
      %1948 = vmatpush1.msra.mxu0 0.0
      %1949 = vmatprep.subr.mxu0 0.0
      %1950 = vmatpush1.msra.mxu0 0.0
      %1951 = vmatprep.subr.mxu0 0.0
      %1952 = vmatpush1.msra.mxu0 0.0
      %1953 = vmatprep.subr.mxu0 0.0
      %1954 = vmatpush1.msra.mxu0 0.0
      %1955 = vmatprep.subr.mxu0 0.0
      %1956 = vmatpush1.msra.mxu0 0.0
      %1957 = vmatprep.subr.mxu0 0.0
      %1958 = vmatpush1.msra.mxu0 0.0
      %1959 = vmatprep.mubr.f32.mxu0 %v1893
      %1960 = vmatmul.mubr.f32.gmra.mrb[0].mxu0 %v1756
      %v1961 = vpop.f32.mrb[0].mxu0
      %v1962 = vadd.f32 %v1889, %v1961
      %v1963 = vpop.f32.mrb[0].mxu0
      %v1964 = vadd.f32 %v1889, %v1963
      %1965 = vdwg.mxu0
      %v1968 = vcombine.low %v1962, %v1964
      %1970 = vst [vmem:[%s629] sm:$0xff] %v1968
      %p1971 = scmp.lt.s32.totalorder %s31, 1
      %s1972 = scalar_select %p1971, %s31, 1
      %s1973 = smul.addr %s1972, 2
      %s1974 = smul.addr %s1973, 4
      %s1975 = scalar_lea.vmem %s20, %s1974
      // Predicated region
      $region101: #{forward.1} parent=99 // pred_check
        %p1976 = pneg %p474
      $region102: #{forward.1} parent=99 // pred_check_branch
        %1978 = sbr.rel (%p1976) target = $region104
      $region103: #{forward.1} parent=99 // pred_region
        _
      $region104: #{forward.1} parent=99 // pred_fallthru
        _
    $region100: #{forward.1} parent=5 // pred_fallthru
      _
    %p1979 = scmp.le.s32.totalorder 2, %s26
    // Predicated region
    $region105: #{forward.1} parent=5 // pred_check
      %p1980 = pneg %p1979
    $region106: #{forward.1} parent=5 // pred_check_branch
      %1982 = sbr.rel (%p1980) target = $region108
    $region107: #{forward.1} parent=5 // pred_region
      %s1983 = ssub.s32 %s26, 2
      // Predicated region
      $region109: #{forward.1} parent=107 // pred_check
        %p1984 = pneg %p480
      $region110: #{forward.1} parent=107 // pred_check_branch
        %1986 = sbr.rel (%p1984) target = $region112
      $region111: #{forward.1} parent=107 // pred_region
        %p1987 = scmp.lt.s32.totalorder %s32, 1
        %s1988 = scalar_select %p1987, %s32, 1
        %s1989 = smul.addr %s1988, 2
        %s1990 = smul.addr %s1989, 4
        %s1991 = scalar_lea.vmem %s20, %s1990
      $region112: #{forward.1} parent=107 // pred_fallthru
        _
    $region108: #{forward.1} parent=5 // pred_fallthru
      _
  $region6: #{forward.1} parent=0 // loop_footer
    %s30 = sadd.s32 1, %s26
  $region7: #{forward.1} parent=0 // loop_footer_branch
    %25 = sbr.rel target = $region3
  $region8: #{forward.1} parent=0 // loop_exit
    _

</llo_original>
